<compile_context>
chip_gen: v6e
topology: v6e:2x2x1
jax: 0.10.0
libtpu: 0.0.40
codegen_flags: <defaults>
</compile_context>

<pallas_src>
import math
import jax
import jax.numpy as jnp
from jax import lax
from jax.experimental import pallas as pl
from jax.experimental.pallas import tpu as pltpu

# ---- small, GPT2-consistent config ----
B = 2          # batch
S = 8          # sequence length
D = 32         # n_embd
H = 4          # n_head
HD = D // H    # head dim
INNER = 4 * D  # n_inner (128)
EPS = 1e-5     # layer_norm_epsilon
MASK_VALUE = -1e9

# MXU operand dtype. Set to jnp.bfloat16 on v6e/v7x for MXU-native matmuls
# (accumulation stays f32 via preferred_element_type); f32 keeps exact module semantics.
CDT = jnp.float32


def _mm(a, b):
    """a @ b on the MXU with f32 accumulation."""
    return jnp.dot(a.astype(CDT), b.astype(CDT), preferred_element_type=jnp.float32)


def _mm_nt(a, b):
    """a @ b.T (contract last dims) on the MXU with f32 accumulation, no explicit transpose."""
    return lax.dot_general(
        a.astype(CDT), b.astype(CDT),
        dimension_numbers=(((1,), (1,)), ((), ())),
        preferred_element_type=jnp.float32)


def _layernorm(x, g, b):
    mu = jnp.mean(x, axis=-1, keepdims=True)
    var = jnp.mean((x - mu) ** 2, axis=-1, keepdims=True)
    return (x - mu) * lax.rsqrt(var + EPS) * g + b


def _gelu_new(x):
    # GPT-2 "gelu_new" (tanh approximation)
    return 0.5 * x * (1.0 + jnp.tanh(
        math.sqrt(2.0 / math.pi) * (x + 0.044715 * x * x * x)))


def gpt2_block_kernel(x_ref, bias_ref,
                      ln1_g_ref, ln1_b_ref,
                      wqkv_ref, bqkv_ref,
                      wo_ref, bo_ref,
                      ln2_g_ref, ln2_b_ref,
                      wfc_ref, bfc_ref,
                      wproj_ref, bproj_ref,
                      out_ref):
    # x_ref: (T, D) with T = B*S tokens (batch-major); bias_ref: (T, T) additive
    # block-diagonal causal mask; wo_ref: (H, HD, D).
    x = x_ref[...].astype(jnp.float32)                       # (T, D)

    # ---- ln_1 ----
    h = _layernorm(x, ln1_g_ref[...], ln1_b_ref[...])        # (T, D)

    # ---- fused QKV projection over ALL tokens at once ----
    qkv = _mm(h, wqkv_ref[...]) + bqkv_ref[...]               # (T, 3D)

    bias = bias_ref[...]                                      # (T, T), 0 / -1e9
    scale = 1.0 / math.sqrt(HD)

    # ---- causal self-attention: each head covers every batch element in one matmul ----
    attn = None
    for hh in range(H):
        q_h = qkv[:, hh * HD:(hh + 1) * HD]                   # (T, HD)
        k_h = qkv[:, D + hh * HD: D + (hh + 1) * HD]          # (T, HD)
        v_h = qkv[:, 2 * D + hh * HD: 2 * D + (hh + 1) * HD]  # (T, HD)

        s = _mm_nt(q_h, k_h) * scale + bias                   # (T, T)
        s = s - jnp.max(s, axis=-1, keepdims=True)
        e = jnp.exp(s)
        denom = jnp.sum(e, axis=-1, keepdims=True)
        p = e * pl.reciprocal(denom, approx=True)             # softmax via EUP reciprocal

        ctx_h = _mm(p, v_h)                                   # (T, HD)
        contrib = _mm(ctx_h, wo_ref[hh])                      # (T, D)  c_proj folded per head
        attn = contrib if attn is None else attn + contrib

    attn_out = attn + bo_ref[...]                             # (T, D)

    # ---- residual 1 ----
    x1 = x + attn_out

    # ---- ln_2 + MLP ----
    h2 = _layernorm(x1, ln2_g_ref[...], ln2_b_ref[...])
    fc = _mm(h2, wfc_ref[...]) + bfc_ref[...]                 # (T, INNER)
    act = _gelu_new(fc)
    mlp_out = _mm(act, wproj_ref[...]) + bproj_ref[...]       # (T, D)

    # ---- residual 2 ----
    out_ref[...] = (x1 + mlp_out).astype(out_ref.dtype)


def _gpt2_block_impl(x, params):
    """x: (B, S, D) float32. params: dict of weights (see init_params)."""
    Bn, Sn, Dn = x.shape
    assert (Bn, Sn, Dn) == (B, S, D)
    T = Bn * Sn

    # Flatten tokens; one kernel invocation handles every batch element.
    x2 = x.reshape(T, Dn)

    # Precompute the block-diagonal (same batch) + causal additive bias wrapper-side.
    tok = jnp.arange(T, dtype=jnp.int32)
    same_batch = (tok[:, None] // Sn) == (tok[None, :] // Sn)
    causal = tok[None, :] <= tok[:, None]
    attn_bias = jnp.where(same_batch & causal, 0.0, MASK_VALUE).astype(jnp.float32)

    # Present c_proj weights head-major so the kernel indexes wo_ref[h] (no in-kernel concat).
    wo3 = params["wo"].reshape(H, HD, D)

    ins = [x2, attn_bias,
           params["ln1_g"], params["ln1_b"],
           params["wqkv"], params["bqkv"],
           wo3, params["bo"],
           params["ln2_g"], params["ln2_b"],
           params["wfc"], params["bfc"],
           params["wproj"], params["bproj"]]

    out2 = pl.pallas_call(
        gpt2_block_kernel,
        out_shape=jax.ShapeDtypeStruct((T, Dn), jnp.float32),
        in_specs=[pl.BlockSpec(memory_space=pltpu.MemorySpace.VMEM) for _ in ins],
        out_specs=pl.BlockSpec(memory_space=pltpu.MemorySpace.VMEM),
    )(*ins)

    return out2.reshape(Bn, Sn, Dn)


gpt2_block = jax.jit(_gpt2_block_impl)


def init_params(key):
    ks = jax.random.split(key, 4)
    std = 0.02
    return {
        "ln1_g": jnp.ones((1, D), jnp.float32),
        "ln1_b": jnp.zeros((1, D), jnp.float32),
        "wqkv": std * jax.random.normal(ks[0], (D, 3 * D), jnp.float32),
        "bqkv": jnp.zeros((1, 3 * D), jnp.float32),
        "wo": std * jax.random.normal(ks[1], (D, D), jnp.float32),
        "bo": jnp.zeros((1, D), jnp.float32),
        "ln2_g": jnp.ones((1, D), jnp.float32),
        "ln2_b": jnp.zeros((1, D), jnp.float32),
        "wfc": std * jax.random.normal(ks[2], (D, INNER), jnp.float32),
        "bfc": jnp.zeros((1, INNER), jnp.float32),
        "wproj": std * jax.random.normal(ks[3], (INNER, D), jnp.float32),
        "bproj": jnp.zeros((1, D), jnp.float32),
    }


def reference(x, p):
    """Pure-JAX reference (matches the PyTorch GPT2Block forward, f32)."""
    def ln(v, g, b):
        mu = v.mean(-1, keepdims=True)
        var = ((v - mu) ** 2).mean(-1, keepdims=True)
        return (v - mu) / jnp.sqrt(var + EPS) * g + b

    h = ln(x, p["ln1_g"], p["ln1_b"])
    qkv = h @ p["wqkv"] + p["bqkv"]
    q, k, v = jnp.split(qkv, 3, axis=-1)
    q = q.reshape(B, S, H, HD).transpose(0, 2, 1, 3)
    k = k.reshape(B, S, H, HD).transpose(0, 2, 1, 3)
    v = v.reshape(B, S, H, HD).transpose(0, 2, 1, 3)
    scores = jnp.einsum("bhqd,bhkd->bhqk", q, k) / math.sqrt(HD)
    causal = jnp.tril(jnp.ones((S, S), bool))
    scores = jnp.where(causal, scores, MASK_VALUE)
    probs = jax.nn.softmax(scores, axis=-1)
    ctx = jnp.einsum("bhqk,bhkd->bhqd", probs, v).transpose(0, 2, 1, 3).reshape(B, S, D)
    attn_out = ctx @ p["wo"] + p["bo"]
    x1 = x + attn_out
    h2 = ln(x1, p["ln2_g"], p["ln2_b"])
    fc = h2 @ p["wfc"] + p["bfc"]
    act = 0.5 * fc * (1.0 + jnp.tanh(math.sqrt(2.0 / math.pi) * (fc + 0.044715 * fc ** 3)))
    return x1 + act @ p["wproj"] + p["bproj"]


if __name__ == "__main__":
    key = jax.random.PRNGKey(0)
    k_x, k_p = jax.random.split(key)
    x = jax.random.normal(k_x, (B, S, D), jnp.float32)
    params = init_params(k_p)

    out = jax.block_until_ready(gpt2_block(x, params))
    ref = reference(x, params)

    assert out.shape == (B, S, D)
    assert bool(jnp.all(jnp.isfinite(out)))
    max_err = float(jnp.max(jnp.abs(out - ref)))
    # tolerance covers the approx-EUP reciprocal in the softmax denominator
    assert max_err < 1e-3, f"mismatch vs reference: max abs err {max_err}"
    print("KERNEL_OK")
</pallas_src>

<mosaic_0001>
module attributes {stable_mosaic.version = 11 : i64} {
  func.func @gpt2_block_kernel(%arg0: memref<16x32xf32, #tpu.memory_space<vmem>>, %arg1: memref<16x16xf32, #tpu.memory_space<vmem>>, %arg2: memref<1x32xf32, #tpu.memory_space<vmem>>, %arg3: memref<1x32xf32, #tpu.memory_space<vmem>>, %arg4: memref<32x96xf32, #tpu.memory_space<vmem>>, %arg5: memref<1x96xf32, #tpu.memory_space<vmem>>, %arg6: memref<4x8x32xf32, #tpu.memory_space<vmem>>, %arg7: memref<1x32xf32, #tpu.memory_space<vmem>>, %arg8: memref<1x32xf32, #tpu.memory_space<vmem>>, %arg9: memref<1x32xf32, #tpu.memory_space<vmem>>, %arg10: memref<32x128xf32, #tpu.memory_space<vmem>>, %arg11: memref<1x128xf32, #tpu.memory_space<vmem>>, %arg12: memref<128x32xf32, #tpu.memory_space<vmem>>, %arg13: memref<1x32xf32, #tpu.memory_space<vmem>>, %arg14: memref<16x32xf32, #tpu.memory_space<vmem>>) attributes {dimension_semantics = [], scalar_prefetch = 0 : i64, scratch_operands = 0 : i64, tpu.core_type = #tpu.core_type<tc>} {
    %c0 = arith.constant 0 : index
    %c0_0 = arith.constant 0 : index
    %0 = vector.load %arg0[%c0, %c0_0] : memref<16x32xf32, #tpu.memory_space<vmem>>, vector<16x32xf32>
    %c0_1 = arith.constant 0 : index
    %c0_2 = arith.constant 0 : index
    %1 = vector.load %arg2[%c0_1, %c0_2] : memref<1x32xf32, #tpu.memory_space<vmem>>, vector<1x32xf32>
    %c0_3 = arith.constant 0 : index
    %c0_4 = arith.constant 0 : index
    %2 = vector.load %arg3[%c0_3, %c0_4] : memref<1x32xf32, #tpu.memory_space<vmem>>, vector<1x32xf32>
    %cst = arith.constant dense<0.000000e+00> : vector<16xf32>
    %3 = vector.multi_reduction <add>, %0, %cst [1] : vector<16x32xf32> to vector<16xf32>
    %4 = vector.shape_cast %3 : vector<16xf32> to vector<16x1xf32>
    %cst_5 = arith.constant 3.200000e+01 : f32
    %5 = vector.broadcast %cst_5 : f32 to vector<16x1xf32>
    %6 = arith.divf %4, %5 : vector<16x1xf32>
    %7 = vector.broadcast %6 : vector<16x1xf32> to vector<16x32xf32>
    %8 = arith.subf %0, %7 : vector<16x32xf32>
    %9 = arith.mulf %8, %8 : vector<16x32xf32>
    %cst_6 = arith.constant dense<0.000000e+00> : vector<16xf32>
    %10 = vector.multi_reduction <add>, %9, %cst_6 [1] : vector<16x32xf32> to vector<16xf32>
    %11 = vector.shape_cast %10 : vector<16xf32> to vector<16x1xf32>
    %cst_7 = arith.constant 3.200000e+01 : f32
    %12 = vector.broadcast %cst_7 : f32 to vector<16x1xf32>
    %13 = arith.divf %11, %12 : vector<16x1xf32>
    %14 = vector.broadcast %6 : vector<16x1xf32> to vector<16x32xf32>
    %15 = arith.subf %0, %14 : vector<16x32xf32>
    %cst_8 = arith.constant 9.99999974E-6 : f32
    %16 = vector.broadcast %cst_8 : f32 to vector<16x1xf32>
    %17 = arith.addf %13, %16 : vector<16x1xf32>
    %18 = math.rsqrt %17 : vector<16x1xf32>
    %19 = vector.broadcast %18 : vector<16x1xf32> to vector<16x32xf32>
    %20 = arith.mulf %15, %19 : vector<16x32xf32>
    %21 = vector.broadcast %1 : vector<1x32xf32> to vector<16x32xf32>
    %22 = arith.mulf %20, %21 : vector<16x32xf32>
    %23 = vector.broadcast %2 : vector<1x32xf32> to vector<16x32xf32>
    %24 = arith.addf %22, %23 : vector<16x32xf32>
    %c0_9 = arith.constant 0 : index
    %c0_10 = arith.constant 0 : index
    %25 = vector.load %arg4[%c0_9, %c0_10] : memref<32x96xf32, #tpu.memory_space<vmem>>, vector<32x96xf32>
    %cst_11 = arith.constant dense<0.000000e+00> : vector<16x96xf32>
    %26 = tpu.matmul %24, %25, %cst_11 {dimension_numbers = #tpu.dot_dimension_numbers<[1], [0], [0], [1], [0, 0, 1, 1], [], []>} : vector<16x32xf32>, vector<32x96xf32>, vector<16x96xf32> -> vector<16x96xf32>
    %c0_12 = arith.constant 0 : index
    %c0_13 = arith.constant 0 : index
    %27 = vector.load %arg5[%c0_12, %c0_13] : memref<1x96xf32, #tpu.memory_space<vmem>>, vector<1x96xf32>
    %28 = vector.broadcast %27 : vector<1x96xf32> to vector<16x96xf32>
    %29 = arith.addf %26, %28 : vector<16x96xf32>
    %c0_14 = arith.constant 0 : index
    %c0_15 = arith.constant 0 : index
    %30 = vector.load %arg1[%c0_14, %c0_15] : memref<16x16xf32, #tpu.memory_space<vmem>>, vector<16x16xf32>
    %31 = vector.extract_strided_slice %29 {offsets = [0, 0], sizes = [16, 8], strides = [1, 1]} : vector<16x96xf32> to vector<16x8xf32>
    %32 = vector.extract_strided_slice %29 {offsets = [0, 32], sizes = [16, 8], strides = [1, 1]} : vector<16x96xf32> to vector<16x8xf32>
    %33 = vector.extract_strided_slice %29 {offsets = [0, 64], sizes = [16, 8], strides = [1, 1]} : vector<16x96xf32> to vector<16x8xf32>
    %cst_16 = arith.constant dense<0.000000e+00> : vector<16x16xf32>
    %34 = tpu.matmul %31, %32, %cst_16 {dimension_numbers = #tpu.dot_dimension_numbers<[1], [1], [0], [0], [0, 0, 1, 0], [], []>} : vector<16x8xf32>, vector<16x8xf32>, vector<16x16xf32> -> vector<16x16xf32>
    %cst_17 = arith.constant 0.353553385 : f32
    %35 = vector.broadcast %cst_17 : f32 to vector<16x16xf32>
    %36 = arith.mulf %34, %35 : vector<16x16xf32>
    %37 = arith.addf %36, %30 : vector<16x16xf32>
    %cst_18 = arith.constant dense<0xFF800000> : vector<16xf32>
    %38 = vector.multi_reduction <maximumf>, %37, %cst_18 [1] : vector<16x16xf32> to vector<16xf32>
    %39 = vector.shape_cast %38 : vector<16xf32> to vector<16x1xf32>
    %40 = vector.broadcast %39 : vector<16x1xf32> to vector<16x16xf32>
    %41 = arith.subf %37, %40 : vector<16x16xf32>
    %42 = math.exp %41 : vector<16x16xf32>
    %cst_19 = arith.constant dense<0.000000e+00> : vector<16xf32>
    %43 = vector.multi_reduction <add>, %42, %cst_19 [1] : vector<16x16xf32> to vector<16xf32>
    %44 = vector.shape_cast %43 : vector<16xf32> to vector<16x1xf32>
    %45 = tpu.reciprocal %44 {approx = true} : vector<16x1xf32> -> vector<16x1xf32>
    %46 = vector.broadcast %45 : vector<16x1xf32> to vector<16x16xf32>
    %47 = arith.mulf %42, %46 : vector<16x16xf32>
    %cst_20 = arith.constant dense<0.000000e+00> : vector<16x8xf32>
    %48 = tpu.matmul %47, %33, %cst_20 {dimension_numbers = #tpu.dot_dimension_numbers<[1], [0], [0], [1], [0, 0, 1, 1], [], []>} : vector<16x16xf32>, vector<16x8xf32>, vector<16x8xf32> -> vector<16x8xf32>
    %c0_21 = arith.constant 0 : index
    %c0_22 = arith.constant 0 : index
    %c0_23 = arith.constant 0 : index
    %49 = vector.load %arg6[%c0_21, %c0_22, %c0_23] : memref<4x8x32xf32, #tpu.memory_space<vmem>>, vector<1x8x32xf32>
    %50 = vector.shape_cast %49 : vector<1x8x32xf32> to vector<8x32xf32>
    %cst_24 = arith.constant dense<0.000000e+00> : vector<16x32xf32>
    %51 = tpu.matmul %48, %50, %cst_24 {dimension_numbers = #tpu.dot_dimension_numbers<[1], [0], [0], [1], [0, 0, 1, 1], [], []>} : vector<16x8xf32>, vector<8x32xf32>, vector<16x32xf32> -> vector<16x32xf32>
    %52 = vector.extract_strided_slice %29 {offsets = [0, 8], sizes = [16, 8], strides = [1, 1]} : vector<16x96xf32> to vector<16x8xf32>
    %53 = vector.extract_strided_slice %29 {offsets = [0, 40], sizes = [16, 8], strides = [1, 1]} : vector<16x96xf32> to vector<16x8xf32>
    %54 = vector.extract_strided_slice %29 {offsets = [0, 72], sizes = [16, 8], strides = [1, 1]} : vector<16x96xf32> to vector<16x8xf32>
    %cst_25 = arith.constant dense<0.000000e+00> : vector<16x16xf32>
    %55 = tpu.matmul %52, %53, %cst_25 {dimension_numbers = #tpu.dot_dimension_numbers<[1], [1], [0], [0], [0, 0, 1, 0], [], []>} : vector<16x8xf32>, vector<16x8xf32>, vector<16x16xf32> -> vector<16x16xf32>
    %cst_26 = arith.constant 0.353553385 : f32
    %56 = vector.broadcast %cst_26 : f32 to vector<16x16xf32>
    %57 = arith.mulf %55, %56 : vector<16x16xf32>
    %58 = arith.addf %57, %30 : vector<16x16xf32>
    %cst_27 = arith.constant dense<0xFF800000> : vector<16xf32>
    %59 = vector.multi_reduction <maximumf>, %58, %cst_27 [1] : vector<16x16xf32> to vector<16xf32>
    %60 = vector.shape_cast %59 : vector<16xf32> to vector<16x1xf32>
    %61 = vector.broadcast %60 : vector<16x1xf32> to vector<16x16xf32>
    %62 = arith.subf %58, %61 : vector<16x16xf32>
    %63 = math.exp %62 : vector<16x16xf32>
    %cst_28 = arith.constant dense<0.000000e+00> : vector<16xf32>
    %64 = vector.multi_reduction <add>, %63, %cst_28 [1] : vector<16x16xf32> to vector<16xf32>
    %65 = vector.shape_cast %64 : vector<16xf32> to vector<16x1xf32>
    %66 = tpu.reciprocal %65 {approx = true} : vector<16x1xf32> -> vector<16x1xf32>
    %67 = vector.broadcast %66 : vector<16x1xf32> to vector<16x16xf32>
    %68 = arith.mulf %63, %67 : vector<16x16xf32>
    %cst_29 = arith.constant dense<0.000000e+00> : vector<16x8xf32>
    %69 = tpu.matmul %68, %54, %cst_29 {dimension_numbers = #tpu.dot_dimension_numbers<[1], [0], [0], [1], [0, 0, 1, 1], [], []>} : vector<16x16xf32>, vector<16x8xf32>, vector<16x8xf32> -> vector<16x8xf32>
    %c1 = arith.constant 1 : index
    %c0_30 = arith.constant 0 : index
    %c0_31 = arith.constant 0 : index
    %70 = vector.load %arg6[%c1, %c0_30, %c0_31] : memref<4x8x32xf32, #tpu.memory_space<vmem>>, vector<1x8x32xf32>
    %71 = vector.shape_cast %70 : vector<1x8x32xf32> to vector<8x32xf32>
    %cst_32 = arith.constant dense<0.000000e+00> : vector<16x32xf32>
    %72 = tpu.matmul %69, %71, %cst_32 {dimension_numbers = #tpu.dot_dimension_numbers<[1], [0], [0], [1], [0, 0, 1, 1], [], []>} : vector<16x8xf32>, vector<8x32xf32>, vector<16x32xf32> -> vector<16x32xf32>
    %73 = arith.addf %51, %72 : vector<16x32xf32>
    %74 = vector.extract_strided_slice %29 {offsets = [0, 16], sizes = [16, 8], strides = [1, 1]} : vector<16x96xf32> to vector<16x8xf32>
    %75 = vector.extract_strided_slice %29 {offsets = [0, 48], sizes = [16, 8], strides = [1, 1]} : vector<16x96xf32> to vector<16x8xf32>
    %76 = vector.extract_strided_slice %29 {offsets = [0, 80], sizes = [16, 8], strides = [1, 1]} : vector<16x96xf32> to vector<16x8xf32>
    %cst_33 = arith.constant dense<0.000000e+00> : vector<16x16xf32>
    %77 = tpu.matmul %74, %75, %cst_33 {dimension_numbers = #tpu.dot_dimension_numbers<[1], [1], [0], [0], [0, 0, 1, 0], [], []>} : vector<16x8xf32>, vector<16x8xf32>, vector<16x16xf32> -> vector<16x16xf32>
    %cst_34 = arith.constant 0.353553385 : f32
    %78 = vector.broadcast %cst_34 : f32 to vector<16x16xf32>
    %79 = arith.mulf %77, %78 : vector<16x16xf32>
    %80 = arith.addf %79, %30 : vector<16x16xf32>
    %cst_35 = arith.constant dense<0xFF800000> : vector<16xf32>
    %81 = vector.multi_reduction <maximumf>, %80, %cst_35 [1] : vector<16x16xf32> to vector<16xf32>
    %82 = vector.shape_cast %81 : vector<16xf32> to vector<16x1xf32>
    %83 = vector.broadcast %82 : vector<16x1xf32> to vector<16x16xf32>
    %84 = arith.subf %80, %83 : vector<16x16xf32>
    %85 = math.exp %84 : vector<16x16xf32>
    %cst_36 = arith.constant dense<0.000000e+00> : vector<16xf32>
    %86 = vector.multi_reduction <add>, %85, %cst_36 [1] : vector<16x16xf32> to vector<16xf32>
    %87 = vector.shape_cast %86 : vector<16xf32> to vector<16x1xf32>
    %88 = tpu.reciprocal %87 {approx = true} : vector<16x1xf32> -> vector<16x1xf32>
    %89 = vector.broadcast %88 : vector<16x1xf32> to vector<16x16xf32>
    %90 = arith.mulf %85, %89 : vector<16x16xf32>
    %cst_37 = arith.constant dense<0.000000e+00> : vector<16x8xf32>
    %91 = tpu.matmul %90, %76, %cst_37 {dimension_numbers = #tpu.dot_dimension_numbers<[1], [0], [0], [1], [0, 0, 1, 1], [], []>} : vector<16x16xf32>, vector<16x8xf32>, vector<16x8xf32> -> vector<16x8xf32>
    %c2 = arith.constant 2 : index
    %c0_38 = arith.constant 0 : index
    %c0_39 = arith.constant 0 : index
    %92 = vector.load %arg6[%c2, %c0_38, %c0_39] : memref<4x8x32xf32, #tpu.memory_space<vmem>>, vector<1x8x32xf32>
    %93 = vector.shape_cast %92 : vector<1x8x32xf32> to vector<8x32xf32>
    %cst_40 = arith.constant dense<0.000000e+00> : vector<16x32xf32>
    %94 = tpu.matmul %91, %93, %cst_40 {dimension_numbers = #tpu.dot_dimension_numbers<[1], [0], [0], [1], [0, 0, 1, 1], [], []>} : vector<16x8xf32>, vector<8x32xf32>, vector<16x32xf32> -> vector<16x32xf32>
    %95 = arith.addf %73, %94 : vector<16x32xf32>
    %96 = vector.extract_strided_slice %29 {offsets = [0, 24], sizes = [16, 8], strides = [1, 1]} : vector<16x96xf32> to vector<16x8xf32>
    %97 = vector.extract_strided_slice %29 {offsets = [0, 56], sizes = [16, 8], strides = [1, 1]} : vector<16x96xf32> to vector<16x8xf32>
    %98 = vector.extract_strided_slice %29 {offsets = [0, 88], sizes = [16, 8], strides = [1, 1]} : vector<16x96xf32> to vector<16x8xf32>
    %cst_41 = arith.constant dense<0.000000e+00> : vector<16x16xf32>
    %99 = tpu.matmul %96, %97, %cst_41 {dimension_numbers = #tpu.dot_dimension_numbers<[1], [1], [0], [0], [0, 0, 1, 0], [], []>} : vector<16x8xf32>, vector<16x8xf32>, vector<16x16xf32> -> vector<16x16xf32>
    %cst_42 = arith.constant 0.353553385 : f32
    %100 = vector.broadcast %cst_42 : f32 to vector<16x16xf32>
    %101 = arith.mulf %99, %100 : vector<16x16xf32>
    %102 = arith.addf %101, %30 : vector<16x16xf32>
    %cst_43 = arith.constant dense<0xFF800000> : vector<16xf32>
    %103 = vector.multi_reduction <maximumf>, %102, %cst_43 [1] : vector<16x16xf32> to vector<16xf32>
    %104 = vector.shape_cast %103 : vector<16xf32> to vector<16x1xf32>
    %105 = vector.broadcast %104 : vector<16x1xf32> to vector<16x16xf32>
    %106 = arith.subf %102, %105 : vector<16x16xf32>
    %107 = math.exp %106 : vector<16x16xf32>
    %cst_44 = arith.constant dense<0.000000e+00> : vector<16xf32>
    %108 = vector.multi_reduction <add>, %107, %cst_44 [1] : vector<16x16xf32> to vector<16xf32>
    %109 = vector.shape_cast %108 : vector<16xf32> to vector<16x1xf32>
    %110 = tpu.reciprocal %109 {approx = true} : vector<16x1xf32> -> vector<16x1xf32>
    %111 = vector.broadcast %110 : vector<16x1xf32> to vector<16x16xf32>
    %112 = arith.mulf %107, %111 : vector<16x16xf32>
    %cst_45 = arith.constant dense<0.000000e+00> : vector<16x8xf32>
    %113 = tpu.matmul %112, %98, %cst_45 {dimension_numbers = #tpu.dot_dimension_numbers<[1], [0], [0], [1], [0, 0, 1, 1], [], []>} : vector<16x16xf32>, vector<16x8xf32>, vector<16x8xf32> -> vector<16x8xf32>
    %c3 = arith.constant 3 : index
    %c0_46 = arith.constant 0 : index
    %c0_47 = arith.constant 0 : index
    %114 = vector.load %arg6[%c3, %c0_46, %c0_47] : memref<4x8x32xf32, #tpu.memory_space<vmem>>, vector<1x8x32xf32>
    %115 = vector.shape_cast %114 : vector<1x8x32xf32> to vector<8x32xf32>
    %cst_48 = arith.constant dense<0.000000e+00> : vector<16x32xf32>
    %116 = tpu.matmul %113, %115, %cst_48 {dimension_numbers = #tpu.dot_dimension_numbers<[1], [0], [0], [1], [0, 0, 1, 1], [], []>} : vector<16x8xf32>, vector<8x32xf32>, vector<16x32xf32> -> vector<16x32xf32>
    %117 = arith.addf %95, %116 : vector<16x32xf32>
    %c0_49 = arith.constant 0 : index
    %c0_50 = arith.constant 0 : index
    %118 = vector.load %arg7[%c0_49, %c0_50] : memref<1x32xf32, #tpu.memory_space<vmem>>, vector<1x32xf32>
    %119 = vector.broadcast %118 : vector<1x32xf32> to vector<16x32xf32>
    %120 = arith.addf %117, %119 : vector<16x32xf32>
    %121 = arith.addf %0, %120 : vector<16x32xf32>
    %c0_51 = arith.constant 0 : index
    %c0_52 = arith.constant 0 : index
    %122 = vector.load %arg8[%c0_51, %c0_52] : memref<1x32xf32, #tpu.memory_space<vmem>>, vector<1x32xf32>
    %c0_53 = arith.constant 0 : index
    %c0_54 = arith.constant 0 : index
    %123 = vector.load %arg9[%c0_53, %c0_54] : memref<1x32xf32, #tpu.memory_space<vmem>>, vector<1x32xf32>
    %cst_55 = arith.constant dense<0.000000e+00> : vector<16xf32>
    %124 = vector.multi_reduction <add>, %121, %cst_55 [1] : vector<16x32xf32> to vector<16xf32>
    %125 = vector.shape_cast %124 : vector<16xf32> to vector<16x1xf32>
    %cst_56 = arith.constant 3.200000e+01 : f32
    %126 = vector.broadcast %cst_56 : f32 to vector<16x1xf32>
    %127 = arith.divf %125, %126 : vector<16x1xf32>
    %128 = vector.broadcast %127 : vector<16x1xf32> to vector<16x32xf32>
    %129 = arith.subf %121, %128 : vector<16x32xf32>
    %130 = arith.mulf %129, %129 : vector<16x32xf32>
    %cst_57 = arith.constant dense<0.000000e+00> : vector<16xf32>
    %131 = vector.multi_reduction <add>, %130, %cst_57 [1] : vector<16x32xf32> to vector<16xf32>
    %132 = vector.shape_cast %131 : vector<16xf32> to vector<16x1xf32>
    %cst_58 = arith.constant 3.200000e+01 : f32
    %133 = vector.broadcast %cst_58 : f32 to vector<16x1xf32>
    %134 = arith.divf %132, %133 : vector<16x1xf32>
    %135 = vector.broadcast %127 : vector<16x1xf32> to vector<16x32xf32>
    %136 = arith.subf %121, %135 : vector<16x32xf32>
    %cst_59 = arith.constant 9.99999974E-6 : f32
    %137 = vector.broadcast %cst_59 : f32 to vector<16x1xf32>
    %138 = arith.addf %134, %137 : vector<16x1xf32>
    %139 = math.rsqrt %138 : vector<16x1xf32>
    %140 = vector.broadcast %139 : vector<16x1xf32> to vector<16x32xf32>
    %141 = arith.mulf %136, %140 : vector<16x32xf32>
    %142 = vector.broadcast %122 : vector<1x32xf32> to vector<16x32xf32>
    %143 = arith.mulf %141, %142 : vector<16x32xf32>
    %144 = vector.broadcast %123 : vector<1x32xf32> to vector<16x32xf32>
    %145 = arith.addf %143, %144 : vector<16x32xf32>
    %c0_60 = arith.constant 0 : index
    %c0_61 = arith.constant 0 : index
    %146 = vector.load %arg10[%c0_60, %c0_61] : memref<32x128xf32, #tpu.memory_space<vmem>>, vector<32x128xf32>
    %cst_62 = arith.constant dense<0.000000e+00> : vector<16x128xf32>
    %147 = tpu.matmul %145, %146, %cst_62 {dimension_numbers = #tpu.dot_dimension_numbers<[1], [0], [0], [1], [0, 0, 1, 1], [], []>} : vector<16x32xf32>, vector<32x128xf32>, vector<16x128xf32> -> vector<16x128xf32>
    %c0_63 = arith.constant 0 : index
    %c0_64 = arith.constant 0 : index
    %148 = vector.load %arg11[%c0_63, %c0_64] : memref<1x128xf32, #tpu.memory_space<vmem>>, vector<1x128xf32>
    %149 = vector.broadcast %148 : vector<1x128xf32> to vector<16x128xf32>
    %150 = arith.addf %147, %149 : vector<16x128xf32>
    %cst_65 = arith.constant 5.000000e-01 : f32
    %151 = vector.broadcast %cst_65 : f32 to vector<16x128xf32>
    %152 = arith.mulf %151, %150 : vector<16x128xf32>
    %cst_66 = arith.constant 4.471500e-02 : f32
    %153 = vector.broadcast %cst_66 : f32 to vector<16x128xf32>
    %154 = arith.mulf %153, %150 : vector<16x128xf32>
    %155 = arith.mulf %154, %150 : vector<16x128xf32>
    %156 = arith.mulf %155, %150 : vector<16x128xf32>
    %157 = arith.addf %150, %156 : vector<16x128xf32>
    %cst_67 = arith.constant 0.797884583 : f32
    %158 = vector.broadcast %cst_67 : f32 to vector<16x128xf32>
    %159 = arith.mulf %158, %157 : vector<16x128xf32>
    %160 = math.tanh %159 : vector<16x128xf32>
    %cst_68 = arith.constant 1.000000e+00 : f32
    %161 = vector.broadcast %cst_68 : f32 to vector<16x128xf32>
    %162 = arith.addf %161, %160 : vector<16x128xf32>
    %163 = arith.mulf %152, %162 : vector<16x128xf32>
    %c0_69 = arith.constant 0 : index
    %c0_70 = arith.constant 0 : index
    %164 = vector.load %arg12[%c0_69, %c0_70] : memref<128x32xf32, #tpu.memory_space<vmem>>, vector<128x32xf32>
    %cst_71 = arith.constant dense<0.000000e+00> : vector<16x32xf32>
    %165 = tpu.matmul %163, %164, %cst_71 {dimension_numbers = #tpu.dot_dimension_numbers<[1], [0], [0], [1], [0, 0, 1, 1], [], []>} : vector<16x128xf32>, vector<128x32xf32>, vector<16x32xf32> -> vector<16x32xf32>
    %c0_72 = arith.constant 0 : index
    %c0_73 = arith.constant 0 : index
    %166 = vector.load %arg13[%c0_72, %c0_73] : memref<1x32xf32, #tpu.memory_space<vmem>>, vector<1x32xf32>
    %167 = vector.broadcast %166 : vector<1x32xf32> to vector<16x32xf32>
    %168 = arith.addf %165, %167 : vector<16x32xf32>
    %169 = arith.addf %121, %168 : vector<16x32xf32>
    %c0_74 = arith.constant 0 : index
    %c0_75 = arith.constant 0 : index
    %170 = vector.load %arg14[%c0_74, %c0_75] : memref<16x32xf32, #tpu.memory_space<vmem>>, vector<16x32xf32>
    tpu.vector_store %arg14[%c0_74, %c0_75], %169 {strides = array<i32>} : memref<16x32xf32, #tpu.memory_space<vmem>>, vector<16x32xf32>,
    return
  }
}

</mosaic_0001>

<llo_original>
// kernel: _gpt2_block_impl.1
$region0: #{_gpt2_block_impl.1}
  #allocation0 [shape = 'u32[]', space=smem, size = 0x4, offset = 0x4, fixed_abs, tag = 'smem constant byte address 0x4 - core index']
  #allocation1 [shape = 'u32[144,128]{1,0:T(1,128)}', space=vmem, size = 0x12000, scoped, tag = 'internal scratch']
  %s0 = inlined_call_operand.vmem [shape: f32[16,32], index: 0, kind: input, shape index: {}]
  %s1 = inlined_call_operand.vmem [shape: f32[16,16], index: 1, kind: input, shape index: {}]
  %s2 = inlined_call_operand.vmem [shape: f32[1,32], index: 2, kind: input, shape index: {}]
  %s3 = inlined_call_operand.vmem [shape: f32[1,32], index: 3, kind: input, shape index: {}]
  %s4 = inlined_call_operand.vmem [shape: f32[32,96], index: 4, kind: input, shape index: {}]
  %s5 = inlined_call_operand.vmem [shape: f32[1,96], index: 5, kind: input, shape index: {}]
  %s6 = inlined_call_operand.vmem [shape: f32[4,8,32], index: 6, kind: input, shape index: {}]
  %s7 = inlined_call_operand.vmem [shape: f32[1,32], index: 7, kind: input, shape index: {}]
  %s8 = inlined_call_operand.vmem [shape: f32[1,32], index: 8, kind: input, shape index: {}]
  %s9 = inlined_call_operand.vmem [shape: f32[1,32], index: 9, kind: input, shape index: {}]
  %s10 = inlined_call_operand.vmem [shape: f32[32,128], index: 10, kind: input, shape index: {}]
  %s11 = inlined_call_operand.vmem [shape: f32[1,128], index: 11, kind: input, shape index: {}]
  %s12 = inlined_call_operand.vmem [shape: f32[128,32], index: 12, kind: input, shape index: {}]
  %s13 = inlined_call_operand.vmem [shape: f32[1,32], index: 13, kind: input, shape index: {}]
  %s14 = inlined_call_operand.hbm [shape: f32[16,32], index: 14, kind: output, shape index: {}]
  %s15 = sld [smem:[#allocation0]]
  $region66: #{_gpt2_block_impl.1} parent=0
    _
  %s17 = ssub.s32 1, %s15
  %s18 = scalar_select 0, %s17, %s15
  $region1: #{_gpt2_block_impl.1} parent=0
    #allocation2 [shape = 'u8[8192]{0}', space=vmem, size = 0x2000, scoped, tag = 'output window, operand 0, single buffered']
    #allocation3 [shape = 's32[1]{0}', space=sflag, size = 0x4, scoped, tag = 'scoped memory for _gpt2_block_impl.1']
    %19 = vsyncpa [#allocation3], 0
    // Predicated region
    $region2: #{_gpt2_block_impl.1} parent=1 // pred_check
      _
    $region3: #{_gpt2_block_impl.1} parent=1 // pred_check_branch
      %21 = sbr.rel (0) target = $region5
    $region4: #{_gpt2_block_impl.1} parent=1 // pred_region
      _
    $region5: #{_gpt2_block_impl.1} parent=1 // pred_fallthru
      _
    // Predicated region
    $region6: #{_gpt2_block_impl.1} parent=1 // pred_check
      _
    $region7: #{_gpt2_block_impl.1} parent=1 // pred_check_branch
      %23 = sbr.rel (0) target = $region9
    $region8: #{_gpt2_block_impl.1} parent=1 // pred_region
      _
    $region9: #{_gpt2_block_impl.1} parent=1 // pred_fallthru
      _
    // Predicated region
    $region10: #{_gpt2_block_impl.1} parent=1 // pred_check
      _
    $region11: #{_gpt2_block_impl.1} parent=1 // pred_check_branch
      %25 = sbr.rel (0) target = $region13
    $region12: #{_gpt2_block_impl.1} parent=1 // pred_region
      _
    $region13: #{_gpt2_block_impl.1} parent=1 // pred_fallthru
      _
    // Predicated region
    $region14: #{_gpt2_block_impl.1} parent=1 // pred_check
      _
    $region15: #{_gpt2_block_impl.1} parent=1 // pred_check_branch
      %27 = sbr.rel (0) target = $region17
    $region16: #{_gpt2_block_impl.1} parent=1 // pred_region
      _
    $region17: #{_gpt2_block_impl.1} parent=1 // pred_fallthru
      _
    // Predicated region
    $region18: #{_gpt2_block_impl.1} parent=1 // pred_check
      _
    $region19: #{_gpt2_block_impl.1} parent=1 // pred_check_branch
      %29 = sbr.rel (0) target = $region21
    $region20: #{_gpt2_block_impl.1} parent=1 // pred_region
      _
    $region21: #{_gpt2_block_impl.1} parent=1 // pred_fallthru
      _
    // Predicated region
    $region22: #{_gpt2_block_impl.1} parent=1 // pred_check
      _
    $region23: #{_gpt2_block_impl.1} parent=1 // pred_check_branch
      %31 = sbr.rel (0) target = $region25
    $region24: #{_gpt2_block_impl.1} parent=1 // pred_region
      _
    $region25: #{_gpt2_block_impl.1} parent=1 // pred_fallthru
      _
    // Predicated region
    $region26: #{_gpt2_block_impl.1} parent=1 // pred_check
      _
    $region27: #{_gpt2_block_impl.1} parent=1 // pred_check_branch
      %33 = sbr.rel (0) target = $region29
    $region28: #{_gpt2_block_impl.1} parent=1 // pred_region
      _
    $region29: #{_gpt2_block_impl.1} parent=1 // pred_fallthru
      _
    // Predicated region
    $region30: #{_gpt2_block_impl.1} parent=1 // pred_check
      _
    $region31: #{_gpt2_block_impl.1} parent=1 // pred_check_branch
      %35 = sbr.rel (0) target = $region33
    $region32: #{_gpt2_block_impl.1} parent=1 // pred_region
      _
    $region33: #{_gpt2_block_impl.1} parent=1 // pred_fallthru
      _
    // Predicated region
    $region34: #{_gpt2_block_impl.1} parent=1 // pred_check
      _
    $region35: #{_gpt2_block_impl.1} parent=1 // pred_check_branch
      %37 = sbr.rel (0) target = $region37
    $region36: #{_gpt2_block_impl.1} parent=1 // pred_region
      _
    $region37: #{_gpt2_block_impl.1} parent=1 // pred_fallthru
      _
    // Predicated region
    $region38: #{_gpt2_block_impl.1} parent=1 // pred_check
      _
    $region39: #{_gpt2_block_impl.1} parent=1 // pred_check_branch
      %39 = sbr.rel (0) target = $region41
    $region40: #{_gpt2_block_impl.1} parent=1 // pred_region
      _
    $region41: #{_gpt2_block_impl.1} parent=1 // pred_fallthru
      _
    // Predicated region
    $region42: #{_gpt2_block_impl.1} parent=1 // pred_check
      _
    $region43: #{_gpt2_block_impl.1} parent=1 // pred_check_branch
      %41 = sbr.rel (0) target = $region45
    $region44: #{_gpt2_block_impl.1} parent=1 // pred_region
      _
    $region45: #{_gpt2_block_impl.1} parent=1 // pred_fallthru
      _
    // Predicated region
    $region46: #{_gpt2_block_impl.1} parent=1 // pred_check
      _
    $region47: #{_gpt2_block_impl.1} parent=1 // pred_check_branch
      %43 = sbr.rel (0) target = $region49
    $region48: #{_gpt2_block_impl.1} parent=1 // pred_region
      _
    $region49: #{_gpt2_block_impl.1} parent=1 // pred_fallthru
      _
    // Predicated region
    $region50: #{_gpt2_block_impl.1} parent=1 // pred_check
      _
    $region51: #{_gpt2_block_impl.1} parent=1 // pred_check_branch
      %45 = sbr.rel (0) target = $region53
    $region52: #{_gpt2_block_impl.1} parent=1 // pred_region
      _
    $region53: #{_gpt2_block_impl.1} parent=1 // pred_fallthru
      _
    // Predicated region
    $region54: #{_gpt2_block_impl.1} parent=1 // pred_check
      _
    $region55: #{_gpt2_block_impl.1} parent=1 // pred_check_branch
      %47 = sbr.rel (0) target = $region57
    $region56: #{_gpt2_block_impl.1} parent=1 // pred_region
      _
    $region57: #{_gpt2_block_impl.1} parent=1 // pred_fallthru
      _
    %v48 = vld [vmem:[%s0] sm:$0xff]
    %v49 = vld [vmem:[%s0 + $0x8] sm:$0xff]
    %v50 = vld [vmem:[%s2] sm:$0x1]
    %v51 = vld [vmem:[%s3] sm:$0x1]
    %vm52 = vcmask 261120
    %v53 = vsel %vm52, %v48, 0.0
    %54 = vadd.xlane.f32.xlu0 %v53
    %v55 = vpop.xlane.xlu0 %54
    %v56 = vsel %vm52, %v49, 0.0
    %57 = vadd.xlane.f32.xlu0 %v56
    %v58 = vpop.xlane.xlu0 %57
    %v59 = vrcp.pop 32.0
    %v60 = vmul.f32 %v55, %v59
    %v61 = vmul.f32 %v58, %v59
    %v62 = vsub.f32 %v48, %v60
    %v63 = vsub.f32 %v49, %v61
    %v64 = vmul.f32 %v62, %v62
    %v65 = vmul.f32 %v63, %v63
    %v66 = vsel %vm52, %v64, 0.0
    %67 = vadd.xlane.f32.xlu0 %v66
    %v68 = vpop.xlane.xlu0 %67
    %v69 = vsel %vm52, %v65, 0.0
    %70 = vadd.xlane.f32.xlu0 %v69
    %v71 = vpop.xlane.xlu0 %70
    %v72 = vmul.f32 %v68, %v59
    %v73 = vmul.f32 %v71, %v59
    %v74 = vadd.f32 %v72, 1e-05
    %v75 = vadd.f32 %v73, 1e-05
    %v76 = vrsqrt.pop %v74
    %v77 = vrsqrt.pop %v75
    %v78 = vmul.f32 %v62, %v76
    %v79 = vmul.f32 %v63, %v77
    %v81 = vlaneseq
    %v82 = vshrl.u32 %v81, 7
    %v83 = vsub.s32 0, %v82
    %v84 = vrot.slane %v50, %v83
    %v86 = vmul.f32 %v78, %v84
    %v87 = vmul.f32 %v79, %v84
    %v89 = vlaneseq
    %v90 = vshrl.u32 %v89, 7
    %v91 = vsub.s32 0, %v90
    %v92 = vrot.slane %v51, %v91
    %v94 = vadd.f32 %v86, %v92
    %v95 = vadd.f32 %v87, %v92
    %v96 = vld [vmem:[%s4] sm:$0xff]
    %v97 = vld [vmem:[%s4 + $0x8] sm:$0xff]
    %v98 = vld [vmem:[%s4 + $0x10] sm:$0xff]
    %v99 = vld [vmem:[%s4 + $0x18] sm:$0xff]
    %v100 = vld [vmem:[%s5] sm:$0x1]
    %v102 = vlaneseq
    %v103 = vshrl.u32 %v102, 7
    %v104 = vsub.s32 0, %v103
    %v105 = vrot.slane %v100, %v104
    %v108 = vsel %vm52, %v94, 0
    %v111 = vsel %vm52, %v95, 0
    %113 = vmatprep.subr.mxu0 0.0
    %114 = vmatpush1.msra.mxu0 0.0
    %115 = vmatprep.subr.mxu0 0.0
    %116 = vmatpush1.msra.mxu0 0.0
    %117 = vmatprep.subr.mxu0 0.0
    %118 = vmatpush1.msra.mxu0 0.0
    %119 = vmatprep.subr.mxu0 0.0
    %120 = vmatpush1.msra.mxu0 0.0
    %121 = vmatprep.subr.mxu0 0.0
    %122 = vmatpush1.msra.mxu0 0.0
    %123 = vmatprep.subr.mxu0 0.0
    %124 = vmatpush1.msra.mxu0 0.0
    %125 = vmatprep.subr.mxu0 0.0
    %126 = vmatpush1.msra.mxu0 0.0
    %127 = vmatprep.subr.mxu0 0.0
    %128 = vmatpush1.msra.mxu0 0.0
    %129 = vmatprep.subr.mxu0 0.0
    %130 = vmatpush1.msra.mxu0 0.0
    %131 = vmatprep.subr.mxu0 0.0
    %132 = vmatpush1.msra.mxu0 0.0
    %133 = vmatprep.subr.mxu0 0.0
    %134 = vmatpush1.msra.mxu0 0.0
    %135 = vmatprep.subr.mxu0 0.0
    %136 = vmatpush1.msra.mxu0 0.0
    %137 = vmatprep.subr.mxu0 0.0
    %138 = vmatpush1.msra.mxu0 %v99
    %139 = vmatprep.subr.mxu0 0.0
    %140 = vmatpush1.msra.mxu0 %v98
    %141 = vmatprep.subr.mxu0 0.0
    %142 = vmatpush1.msra.mxu0 %v97
    %143 = vmatprep.subr.mxu0 0.0
    %144 = vmatpush1.msra.mxu0 %v96
    %145 = vmatprep.subr.mxu0 0.0
    %146 = vmatpush2.msra.mxu0 0.0
    %147 = vmatprep.subr.mxu0 0.0
    %148 = vmatpush2.msra.mxu0 0.0
    %149 = vmatprep.subr.mxu0 0.0
    %150 = vmatpush2.msra.mxu0 0.0
    %151 = vmatprep.subr.mxu0 0.0
    %152 = vmatpush2.msra.mxu0 0.0
    %153 = vmatprep.subr.mxu0 0.0
    %154 = vmatpush2.msra.mxu0 0.0
    %155 = vmatprep.subr.mxu0 0.0
    %156 = vmatpush2.msra.mxu0 0.0
    %157 = vmatprep.subr.mxu0 0.0
    %158 = vmatpush2.msra.mxu0 0.0
    %159 = vmatprep.subr.mxu0 0.0
    %160 = vmatpush2.msra.mxu0 0.0
    %161 = vmatprep.subr.mxu0 0.0
    %162 = vmatpush2.msra.mxu0 0.0
    %163 = vmatprep.subr.mxu0 0.0
    %164 = vmatpush2.msra.mxu0 0.0
    %165 = vmatprep.subr.mxu0 0.0
    %166 = vmatpush2.msra.mxu0 0.0
    %167 = vmatprep.subr.mxu0 0.0
    %168 = vmatpush2.msra.mxu0 0.0
    %169 = vmatprep.subr.mxu0 0.0
    %170 = vmatpush2.msra.mxu0 0.0
    %171 = vmatprep.subr.mxu0 0.0
    %172 = vmatpush2.msra.mxu0 0.0
    %173 = vmatprep.subr.mxu0 0.0
    %174 = vmatpush2.msra.mxu0 0.0
    %175 = vmatprep.subr.mxu0 0.0
    %176 = vmatpush2.msra.mxu0 0.0
    %177 = vmatprep.mubr.f32.mxu0 0.0
    %178 = vmatmul.mubr.f32.gmra.mxu0 %v108
    %v179 = vpop.f32.mrf.mxu0
    %v180 = vadd.f32 %v105, %v179
    %v181 = vpop.f32.mrf.mxu0
    %182 = vmatprep.mubr.f32.mxu0 0.0
    %183 = vmatmul.mubr.f32.gmra.mxu0 %v111
    %v184 = vpop.f32.mrf.mxu0
    %v185 = vadd.f32 %v105, %v184
    %v186 = vpop.f32.mrf.mxu0
    %187 = vdwg.mxu0
    %v188 = vld [vmem:[%s1] sm:$0xff]
    %v189 = vld [vmem:[%s1 + $0x8] sm:$0xff]
    %192 = vrot.lane.b32.xlu0 %v180, 96
    %v193 = vpop.permute.xlu0 %192
    %194 = vrot.lane.b32.xlu0 %v185, 96
    %v195 = vpop.permute.xlu0 %194
    %vm196 = vcmask 64512
    %v197 = vsel %vm196, %v180, 0
    %v199 = vsel %vm196, %v185, 0
    %v201 = vsel %vm196, %v193, 0
    %v203 = vsel %vm196, %v195, 0
    %205 = vmatprep.subr.mxu0 0.0
    %206 = vmatpush1.xpose.msra.mxu0 0.0
    %207 = vmatprep.subr.mxu0 0.0
    %208 = vmatpush1.xpose.msra.mxu0 0.0
    %209 = vmatprep.subr.mxu0 0.0
    %210 = vmatpush1.xpose.msra.mxu0 0.0
    %211 = vmatprep.subr.mxu0 0.0
    %212 = vmatpush1.xpose.msra.mxu0 0.0
    %213 = vmatprep.subr.mxu0 0.0
    %214 = vmatpush1.xpose.msra.mxu0 0.0
    %215 = vmatprep.subr.mxu0 0.0
    %216 = vmatpush1.xpose.msra.mxu0 0.0
    %217 = vmatprep.subr.mxu0 0.0
    %218 = vmatpush1.xpose.msra.mxu0 0.0
    %219 = vmatprep.subr.mxu0 0.0
    %220 = vmatpush1.xpose.msra.mxu0 0.0
    %221 = vmatprep.subr.mxu0 0.0
    %222 = vmatpush1.xpose.msra.mxu0 0.0
    %223 = vmatprep.subr.mxu0 0.0
    %224 = vmatpush1.xpose.msra.mxu0 0.0
    %225 = vmatprep.subr.mxu0 0.0
    %226 = vmatpush1.xpose.msra.mxu0 0.0
    %227 = vmatprep.subr.mxu0 0.0
    %228 = vmatpush1.xpose.msra.mxu0 0.0
    %229 = vmatprep.subr.mxu0 0.0
    %230 = vmatpush1.xpose.msra.mxu0 0.0
    %231 = vmatprep.subr.mxu0 0.0
    %232 = vmatpush1.xpose.msra.mxu0 0.0
    %233 = vmatprep.subr.mxu0 0.0
    %234 = vmatpush1.xpose.msra.mxu0 %v203
    %235 = vmatprep.subr.mxu0 0.0
    %236 = vmatpush1.xpose.msra.mxu0 %v201
    %237 = vmatprep.subr.mxu0 0.0
    %238 = vmatpush2.xpose.msra.mxu0 0.0
    %239 = vmatprep.subr.mxu0 0.0
    %240 = vmatpush2.xpose.msra.mxu0 0.0
    %241 = vmatprep.subr.mxu0 0.0
    %242 = vmatpush2.xpose.msra.mxu0 0.0
    %243 = vmatprep.subr.mxu0 0.0
    %244 = vmatpush2.xpose.msra.mxu0 0.0
    %245 = vmatprep.subr.mxu0 0.0
    %246 = vmatpush2.xpose.msra.mxu0 0.0
    %247 = vmatprep.subr.mxu0 0.0
    %248 = vmatpush2.xpose.msra.mxu0 0.0
    %249 = vmatprep.subr.mxu0 0.0
    %250 = vmatpush2.xpose.msra.mxu0 0.0
    %251 = vmatprep.subr.mxu0 0.0
    %252 = vmatpush2.xpose.msra.mxu0 0.0
    %253 = vmatprep.subr.mxu0 0.0
    %254 = vmatpush2.xpose.msra.mxu0 0.0
    %255 = vmatprep.subr.mxu0 0.0
    %256 = vmatpush2.xpose.msra.mxu0 0.0
    %257 = vmatprep.subr.mxu0 0.0
    %258 = vmatpush2.xpose.msra.mxu0 0.0
    %259 = vmatprep.subr.mxu0 0.0
    %260 = vmatpush2.xpose.msra.mxu0 0.0
    %261 = vmatprep.subr.mxu0 0.0
    %262 = vmatpush2.xpose.msra.mxu0 0.0
    %263 = vmatprep.subr.mxu0 0.0
    %264 = vmatpush2.xpose.msra.mxu0 0.0
    %265 = vmatprep.subr.mxu0 0.0
    %266 = vmatpush2.xpose.msra.mxu0 0.0
    %267 = vmatprep.subr.mxu0 0.0
    %268 = vmatpush2.xpose.msra.mxu0 0.0
    %269 = vmatprep.mubr.f32.mxu0 0.0
    %270 = vmatmul.mubr.f32.gmra.mxu0 %v197
    %v271 = vpop.f32.mrf.mxu0
    %v272 = vadd.f32 0.0, %v271
    %v273 = vpop.f32.mrf.mxu0
    %274 = vmatprep.mubr.f32.mxu0 0.0
    %275 = vmatmul.mubr.f32.gmra.mxu0 %v199
    %v276 = vpop.f32.mrf.mxu0
    %v277 = vadd.f32 0.0, %v276
    %v278 = vpop.f32.mrf.mxu0
    %279 = vdwg.mxu0
    %v280 = vmul.f32 %v272, 0.35355338
    %v281 = vmul.f32 %v277, 0.35355338
    %v282 = vadd.f32 %v280, %v188
    %v283 = vadd.f32 %v281, %v189
    %vm284 = vcmask 130048
    %v285 = vsel %vm284, %v282, -inf
    %286 = vmax.xlane.f32.xlu0 %v285
    %v287 = vpop.xlane.xlu0 %286
    %v288 = vsel %vm284, %v283, -inf
    %289 = vmax.xlane.f32.xlu0 %v288
    %v290 = vpop.xlane.xlu0 %289
    %v291 = vsub.f32 %v282, %v287
    %v292 = vsub.f32 %v283, %v290
    %v293 = vmul.f32 %v291, 1.442695
    %v294 = vpow.pop %v293
    %v295 = vmul.f32 %v292, 1.442695
    %v296 = vpow.pop %v295
    %v297 = vsel %vm284, %v294, 0.0
    %298 = vadd.xlane.f32.xlu0 %v297
    %v299 = vpop.xlane.xlu0 %298
    %v300 = vsel %vm284, %v296, 0.0
    %301 = vadd.xlane.f32.xlu0 %v300
    %v302 = vpop.xlane.xlu0 %301
    %v303 = vrcp.pop %v299
    %v304 = vrcp.pop %v302
    %v305 = vmul.f32 %v294, %v303
    %v306 = vmul.f32 %v296, %v304
    %307 = vrot.lane.b32.xlu0 %v180, 64
    %v308 = vpop.permute.xlu0 %307
    %309 = vrot.lane.b32.xlu0 %v185, 64
    %v310 = vpop.permute.xlu0 %309
    %v314 = vsel %vm284, %v305, 0
    %v317 = vsel %vm284, %v306, 0
    %319 = vmatprep.subr.mxu0 0.0
    %320 = vmatpush1.msra.mxu0 0.0
    %321 = vmatprep.subr.mxu0 0.0
    %322 = vmatpush1.msra.mxu0 0.0
    %323 = vmatprep.subr.mxu0 0.0
    %324 = vmatpush1.msra.mxu0 0.0
    %325 = vmatprep.subr.mxu0 0.0
    %326 = vmatpush1.msra.mxu0 0.0
    %327 = vmatprep.subr.mxu0 0.0
    %328 = vmatpush1.msra.mxu0 0.0
    %329 = vmatprep.subr.mxu0 0.0
    %330 = vmatpush1.msra.mxu0 0.0
    %331 = vmatprep.subr.mxu0 0.0
    %332 = vmatpush1.msra.mxu0 0.0
    %333 = vmatprep.subr.mxu0 0.0
    %334 = vmatpush1.msra.mxu0 0.0
    %335 = vmatprep.subr.mxu0 0.0
    %336 = vmatpush1.msra.mxu0 0.0
    %337 = vmatprep.subr.mxu0 0.0
    %338 = vmatpush1.msra.mxu0 0.0
    %339 = vmatprep.subr.mxu0 0.0
    %340 = vmatpush1.msra.mxu0 0.0
    %341 = vmatprep.subr.mxu0 0.0
    %342 = vmatpush1.msra.mxu0 0.0
    %343 = vmatprep.subr.mxu0 0.0
    %344 = vmatpush1.msra.mxu0 0.0
    %345 = vmatprep.subr.mxu0 0.0
    %346 = vmatpush1.msra.mxu0 0.0
    %347 = vmatprep.subr.mxu0 0.0
    %348 = vmatpush1.msra.mxu0 %v310
    %349 = vmatprep.subr.mxu0 0.0
    %350 = vmatpush1.msra.mxu0 %v308
    %351 = vmatprep.subr.mxu0 0.0
    %352 = vmatpush2.msra.mxu0 0.0
    %353 = vmatprep.subr.mxu0 0.0
    %354 = vmatpush2.msra.mxu0 0.0
    %355 = vmatprep.subr.mxu0 0.0
    %356 = vmatpush2.msra.mxu0 0.0
    %357 = vmatprep.subr.mxu0 0.0
    %358 = vmatpush2.msra.mxu0 0.0
    %359 = vmatprep.subr.mxu0 0.0
    %360 = vmatpush2.msra.mxu0 0.0
    %361 = vmatprep.subr.mxu0 0.0
    %362 = vmatpush2.msra.mxu0 0.0
    %363 = vmatprep.subr.mxu0 0.0
    %364 = vmatpush2.msra.mxu0 0.0
    %365 = vmatprep.subr.mxu0 0.0
    %366 = vmatpush2.msra.mxu0 0.0
    %367 = vmatprep.subr.mxu0 0.0
    %368 = vmatpush2.msra.mxu0 0.0
    %369 = vmatprep.subr.mxu0 0.0
    %370 = vmatpush2.msra.mxu0 0.0
    %371 = vmatprep.subr.mxu0 0.0
    %372 = vmatpush2.msra.mxu0 0.0
    %373 = vmatprep.subr.mxu0 0.0
    %374 = vmatpush2.msra.mxu0 0.0
    %375 = vmatprep.subr.mxu0 0.0
    %376 = vmatpush2.msra.mxu0 0.0
    %377 = vmatprep.subr.mxu0 0.0
    %378 = vmatpush2.msra.mxu0 0.0
    %379 = vmatprep.subr.mxu0 0.0
    %380 = vmatpush2.msra.mxu0 0.0
    %381 = vmatprep.subr.mxu0 0.0
    %382 = vmatpush2.msra.mxu0 0.0
    %383 = vmatprep.mubr.f32.mxu0 0.0
    %384 = vmatmul.mubr.f32.gmra.mxu0 %v314
    %v385 = vpop.f32.mrf.mxu0
    %v386 = vadd.f32 0.0, %v385
    %v387 = vpop.f32.mrf.mxu0
    %388 = vmatprep.mubr.f32.mxu0 0.0
    %389 = vmatmul.mubr.f32.gmra.mxu0 %v317
    %v390 = vpop.f32.mrf.mxu0
    %v391 = vadd.f32 0.0, %v390
    %v392 = vpop.f32.mrf.mxu0
    %393 = vdwg.mxu0
    %v394 = vld [vmem:[%s6] sm:$0xff]
    %395 = vrot.lane.b32.xlu0 %v180, 120
    %v396 = vpop.permute.xlu0 %395
    %397 = vrot.lane.b32.xlu0 %v185, 120
    %v398 = vpop.permute.xlu0 %397
    %399 = vrot.lane.b32.xlu0 %v180, 88
    %v400 = vpop.permute.xlu0 %399
    %401 = vrot.lane.b32.xlu0 %v185, 88
    %v402 = vpop.permute.xlu0 %401
    %v403 = vsel %vm196, %v396, 0
    %v405 = vsel %vm196, %v398, 0
    %v407 = vsel %vm196, %v400, 0
    %v409 = vsel %vm196, %v402, 0
    %411 = vmatprep.subr.mxu0 0.0
    %412 = vmatpush1.xpose.msra.mxu0 0.0
    %413 = vmatprep.subr.mxu0 0.0
    %414 = vmatpush1.xpose.msra.mxu0 0.0
    %415 = vmatprep.subr.mxu0 0.0
    %416 = vmatpush1.xpose.msra.mxu0 0.0
    %417 = vmatprep.subr.mxu0 0.0
    %418 = vmatpush1.xpose.msra.mxu0 0.0
    %419 = vmatprep.subr.mxu0 0.0
    %420 = vmatpush1.xpose.msra.mxu0 0.0
    %421 = vmatprep.subr.mxu0 0.0
    %422 = vmatpush1.xpose.msra.mxu0 0.0
    %423 = vmatprep.subr.mxu0 0.0
    %424 = vmatpush1.xpose.msra.mxu0 0.0
    %425 = vmatprep.subr.mxu0 0.0
    %426 = vmatpush1.xpose.msra.mxu0 0.0
    %427 = vmatprep.subr.mxu0 0.0
    %428 = vmatpush1.xpose.msra.mxu0 0.0
    %429 = vmatprep.subr.mxu0 0.0
    %430 = vmatpush1.xpose.msra.mxu0 0.0
    %431 = vmatprep.subr.mxu0 0.0
    %432 = vmatpush1.xpose.msra.mxu0 0.0
    %433 = vmatprep.subr.mxu0 0.0
    %434 = vmatpush1.xpose.msra.mxu0 0.0
    %435 = vmatprep.subr.mxu0 0.0
    %436 = vmatpush1.xpose.msra.mxu0 0.0
    %437 = vmatprep.subr.mxu0 0.0
    %438 = vmatpush1.xpose.msra.mxu0 0.0
    %439 = vmatprep.subr.mxu0 0.0
    %440 = vmatpush1.xpose.msra.mxu0 %v409
    %441 = vmatprep.subr.mxu0 0.0
    %442 = vmatpush1.xpose.msra.mxu0 %v407
    %443 = vmatprep.subr.mxu0 0.0
    %444 = vmatpush2.xpose.msra.mxu0 0.0
    %445 = vmatprep.subr.mxu0 0.0
    %446 = vmatpush2.xpose.msra.mxu0 0.0
    %447 = vmatprep.subr.mxu0 0.0
    %448 = vmatpush2.xpose.msra.mxu0 0.0
    %449 = vmatprep.subr.mxu0 0.0
    %450 = vmatpush2.xpose.msra.mxu0 0.0
    %451 = vmatprep.subr.mxu0 0.0
    %452 = vmatpush2.xpose.msra.mxu0 0.0
    %453 = vmatprep.subr.mxu0 0.0
    %454 = vmatpush2.xpose.msra.mxu0 0.0
    %455 = vmatprep.subr.mxu0 0.0
    %456 = vmatpush2.xpose.msra.mxu0 0.0
    %457 = vmatprep.subr.mxu0 0.0
    %458 = vmatpush2.xpose.msra.mxu0 0.0
    %459 = vmatprep.subr.mxu0 0.0
    %460 = vmatpush2.xpose.msra.mxu0 0.0
    %461 = vmatprep.subr.mxu0 0.0
    %462 = vmatpush2.xpose.msra.mxu0 0.0
    %463 = vmatprep.subr.mxu0 0.0
    %464 = vmatpush2.xpose.msra.mxu0 0.0
    %465 = vmatprep.subr.mxu0 0.0
    %466 = vmatpush2.xpose.msra.mxu0 0.0
    %467 = vmatprep.subr.mxu0 0.0
    %468 = vmatpush2.xpose.msra.mxu0 0.0
    %469 = vmatprep.subr.mxu0 0.0
    %470 = vmatpush2.xpose.msra.mxu0 0.0
    %471 = vmatprep.subr.mxu0 0.0
    %472 = vmatpush2.xpose.msra.mxu0 0.0
    %473 = vmatprep.subr.mxu0 0.0
    %474 = vmatpush2.xpose.msra.mxu0 0.0
    %475 = vmatprep.mubr.f32.mxu0 0.0
    %476 = vmatmul.mubr.f32.gmra.mxu0 %v403
    %v477 = vpop.f32.mrf.mxu0
    %v478 = vadd.f32 0.0, %v477
    %v479 = vpop.f32.mrf.mxu0
    %480 = vmatprep.mubr.f32.mxu0 0.0
    %481 = vmatmul.mubr.f32.gmra.mxu0 %v405
    %v482 = vpop.f32.mrf.mxu0
    %v483 = vadd.f32 0.0, %v482
    %v484 = vpop.f32.mrf.mxu0
    %485 = vdwg.mxu0
    %v486 = vmul.f32 %v478, 0.35355338
    %v487 = vmul.f32 %v483, 0.35355338
    %v488 = vadd.f32 %v486, %v188
    %v489 = vadd.f32 %v487, %v189
    %v490 = vsel %vm284, %v488, -inf
    %491 = vmax.xlane.f32.xlu0 %v490
    %v492 = vpop.xlane.xlu0 %491
    %v493 = vsel %vm284, %v489, -inf
    %494 = vmax.xlane.f32.xlu0 %v493
    %v495 = vpop.xlane.xlu0 %494
    %v496 = vsub.f32 %v488, %v492
    %v497 = vsub.f32 %v489, %v495
    %v498 = vmul.f32 %v496, 1.442695
    %v499 = vpow.pop %v498
    %v500 = vmul.f32 %v497, 1.442695
    %v501 = vpow.pop %v500
    %v502 = vsel %vm284, %v499, 0.0
    %503 = vadd.xlane.f32.xlu0 %v502
    %v504 = vpop.xlane.xlu0 %503
    %v505 = vsel %vm284, %v501, 0.0
    %506 = vadd.xlane.f32.xlu0 %v505
    %v507 = vpop.xlane.xlu0 %506
    %v508 = vrcp.pop %v504
    %v509 = vrcp.pop %v507
    %v510 = vmul.f32 %v499, %v508
    %v511 = vmul.f32 %v501, %v509
    %512 = vrot.lane.b32.xlu0 %v180, 56
    %v513 = vpop.permute.xlu0 %512
    %514 = vrot.lane.b32.xlu0 %v185, 56
    %v515 = vpop.permute.xlu0 %514
    %v519 = vsel %vm284, %v510, 0
    %v522 = vsel %vm284, %v511, 0
    %524 = vmatprep.subr.mxu0 0.0
    %525 = vmatpush1.msra.mxu0 0.0
    %526 = vmatprep.subr.mxu0 0.0
    %527 = vmatpush1.msra.mxu0 0.0
    %528 = vmatprep.subr.mxu0 0.0
    %529 = vmatpush1.msra.mxu0 0.0
    %530 = vmatprep.subr.mxu0 0.0
    %531 = vmatpush1.msra.mxu0 0.0
    %532 = vmatprep.subr.mxu0 0.0
    %533 = vmatpush1.msra.mxu0 0.0
    %534 = vmatprep.subr.mxu0 0.0
    %535 = vmatpush1.msra.mxu0 0.0
    %536 = vmatprep.subr.mxu0 0.0
    %537 = vmatpush1.msra.mxu0 0.0
    %538 = vmatprep.subr.mxu0 0.0
    %539 = vmatpush1.msra.mxu0 0.0
    %540 = vmatprep.subr.mxu0 0.0
    %541 = vmatpush1.msra.mxu0 0.0
    %542 = vmatprep.subr.mxu0 0.0
    %543 = vmatpush1.msra.mxu0 0.0
    %544 = vmatprep.subr.mxu0 0.0
    %545 = vmatpush1.msra.mxu0 0.0
    %546 = vmatprep.subr.mxu0 0.0
    %547 = vmatpush1.msra.mxu0 0.0
    %548 = vmatprep.subr.mxu0 0.0
    %549 = vmatpush1.msra.mxu0 0.0
    %550 = vmatprep.subr.mxu0 0.0
    %551 = vmatpush1.msra.mxu0 0.0
    %552 = vmatprep.subr.mxu0 0.0
    %553 = vmatpush1.msra.mxu0 %v515
    %554 = vmatprep.subr.mxu0 0.0
    %555 = vmatpush1.msra.mxu0 %v513
    %556 = vmatprep.subr.mxu0 0.0
    %557 = vmatpush2.msra.mxu0 0.0
    %558 = vmatprep.subr.mxu0 0.0
    %559 = vmatpush2.msra.mxu0 0.0
    %560 = vmatprep.subr.mxu0 0.0
    %561 = vmatpush2.msra.mxu0 0.0
    %562 = vmatprep.subr.mxu0 0.0
    %563 = vmatpush2.msra.mxu0 0.0
    %564 = vmatprep.subr.mxu0 0.0
    %565 = vmatpush2.msra.mxu0 0.0
    %566 = vmatprep.subr.mxu0 0.0
    %567 = vmatpush2.msra.mxu0 0.0
    %568 = vmatprep.subr.mxu0 0.0
    %569 = vmatpush2.msra.mxu0 0.0
    %570 = vmatprep.subr.mxu0 0.0
    %571 = vmatpush2.msra.mxu0 0.0
    %572 = vmatprep.subr.mxu0 0.0
    %573 = vmatpush2.msra.mxu0 0.0
    %574 = vmatprep.subr.mxu0 0.0
    %575 = vmatpush2.msra.mxu0 0.0
    %576 = vmatprep.subr.mxu0 0.0
    %577 = vmatpush2.msra.mxu0 0.0
    %578 = vmatprep.subr.mxu0 0.0
    %579 = vmatpush2.msra.mxu0 0.0
    %580 = vmatprep.subr.mxu0 0.0
    %581 = vmatpush2.msra.mxu0 0.0
    %582 = vmatprep.subr.mxu0 0.0
    %583 = vmatpush2.msra.mxu0 0.0
    %584 = vmatprep.subr.mxu0 0.0
    %585 = vmatpush2.msra.mxu0 0.0
    %586 = vmatprep.subr.mxu0 0.0
    %587 = vmatpush2.msra.mxu0 0.0
    %588 = vmatprep.mubr.f32.mxu0 0.0
    %589 = vmatmul.mubr.f32.gmra.mxu0 %v519
    %v590 = vpop.f32.mrf.mxu0
    %v591 = vadd.f32 0.0, %v590
    %v592 = vpop.f32.mrf.mxu0
    %593 = vmatprep.mubr.f32.mxu0 0.0
    %594 = vmatmul.mubr.f32.gmra.mxu0 %v522
    %v595 = vpop.f32.mrf.mxu0
    %v596 = vadd.f32 0.0, %v595
    %v597 = vpop.f32.mrf.mxu0
    %598 = vdwg.mxu0
    %s599 = scalar_lea.vmem %s6, 8
    %v600 = vld [vmem:[%s599] sm:$0xff]
    %v602 = vsel %vm196, %v591, 0
    %v605 = vsel %vm196, %v596, 0
    %607 = vmatprep.subr.mxu0 0.0
    %608 = vmatpush1.msra.mxu0 0.0
    %609 = vmatprep.subr.mxu0 0.0
    %610 = vmatpush1.msra.mxu0 0.0
    %611 = vmatprep.subr.mxu0 0.0
    %612 = vmatpush1.msra.mxu0 0.0
    %613 = vmatprep.subr.mxu0 0.0
    %614 = vmatpush1.msra.mxu0 0.0
    %615 = vmatprep.subr.mxu0 0.0
    %616 = vmatpush1.msra.mxu0 0.0
    %617 = vmatprep.subr.mxu0 0.0
    %618 = vmatpush1.msra.mxu0 0.0
    %619 = vmatprep.subr.mxu0 0.0
    %620 = vmatpush1.msra.mxu0 0.0
    %621 = vmatprep.subr.mxu0 0.0
    %622 = vmatpush1.msra.mxu0 0.0
    %623 = vmatprep.subr.mxu0 0.0
    %624 = vmatpush1.msra.mxu0 0.0
    %625 = vmatprep.subr.mxu0 0.0
    %626 = vmatpush1.msra.mxu0 0.0
    %627 = vmatprep.subr.mxu0 0.0
    %628 = vmatpush1.msra.mxu0 0.0
    %629 = vmatprep.subr.mxu0 0.0
    %630 = vmatpush1.msra.mxu0 0.0
    %631 = vmatprep.subr.mxu0 0.0
    %632 = vmatpush1.msra.mxu0 0.0
    %633 = vmatprep.subr.mxu0 0.0
    %634 = vmatpush1.msra.mxu0 0.0
    %635 = vmatprep.subr.mxu0 0.0
    %636 = vmatpush1.msra.mxu0 0.0
    %637 = vmatprep.subr.mxu0 0.0
    %638 = vmatpush1.msra.mxu0 %v600
    %639 = vmatprep.subr.mxu0 0.0
    %640 = vmatpush2.msra.mxu0 0.0
    %641 = vmatprep.subr.mxu0 0.0
    %642 = vmatpush2.msra.mxu0 0.0
    %643 = vmatprep.subr.mxu0 0.0
    %644 = vmatpush2.msra.mxu0 0.0
    %645 = vmatprep.subr.mxu0 0.0
    %646 = vmatpush2.msra.mxu0 0.0
    %647 = vmatprep.subr.mxu0 0.0
    %648 = vmatpush2.msra.mxu0 0.0
    %649 = vmatprep.subr.mxu0 0.0
    %650 = vmatpush2.msra.mxu0 0.0
    %651 = vmatprep.subr.mxu0 0.0
    %652 = vmatpush2.msra.mxu0 0.0
    %653 = vmatprep.subr.mxu0 0.0
    %654 = vmatpush2.msra.mxu0 0.0
    %655 = vmatprep.subr.mxu0 0.0
    %656 = vmatpush2.msra.mxu0 0.0
    %657 = vmatprep.subr.mxu0 0.0
    %658 = vmatpush2.msra.mxu0 0.0
    %659 = vmatprep.subr.mxu0 0.0
    %660 = vmatpush2.msra.mxu0 0.0
    %661 = vmatprep.subr.mxu0 0.0
    %662 = vmatpush2.msra.mxu0 0.0
    %663 = vmatprep.subr.mxu0 0.0
    %664 = vmatpush2.msra.mxu0 0.0
    %665 = vmatprep.subr.mxu0 0.0
    %666 = vmatpush2.msra.mxu0 0.0
    %667 = vmatprep.subr.mxu0 0.0
    %668 = vmatpush2.msra.mxu0 0.0
    %669 = vmatprep.subr.mxu0 0.0
    %670 = vmatpush2.msra.mxu0 0.0
    %671 = vmatprep.mubr.f32.mxu0 0.0
    %672 = vmatmul.mubr.f32.gmra.mxu0 %v602
    %v673 = vpop.f32.mrf.mxu0
    %v674 = vadd.f32 0.0, %v673
    %v675 = vpop.f32.mrf.mxu0
    %676 = vmatprep.mubr.f32.mxu0 0.0
    %677 = vmatmul.mubr.f32.gmra.mxu0 %v605
    %v678 = vpop.f32.mrf.mxu0
    %v679 = vadd.f32 0.0, %v678
    %v680 = vpop.f32.mrf.mxu0
    %681 = vdwg.mxu0
    %v683 = vsel %vm196, %v386, 0
    %v686 = vsel %vm196, %v391, 0
    %688 = vmatprep.subr.mxu0 0.0
    %689 = vmatpush1.msra.mxu0 0.0
    %690 = vmatprep.subr.mxu0 0.0
    %691 = vmatpush1.msra.mxu0 0.0
    %692 = vmatprep.subr.mxu0 0.0
    %693 = vmatpush1.msra.mxu0 0.0
    %694 = vmatprep.subr.mxu0 0.0
    %695 = vmatpush1.msra.mxu0 0.0
    %696 = vmatprep.subr.mxu0 0.0
    %697 = vmatpush1.msra.mxu0 0.0
    %698 = vmatprep.subr.mxu0 0.0
    %699 = vmatpush1.msra.mxu0 0.0
    %700 = vmatprep.subr.mxu0 0.0
    %701 = vmatpush1.msra.mxu0 0.0
    %702 = vmatprep.subr.mxu0 0.0
    %703 = vmatpush1.msra.mxu0 0.0
    %704 = vmatprep.subr.mxu0 0.0
    %705 = vmatpush1.msra.mxu0 0.0
    %706 = vmatprep.subr.mxu0 0.0
    %707 = vmatpush1.msra.mxu0 0.0
    %708 = vmatprep.subr.mxu0 0.0
    %709 = vmatpush1.msra.mxu0 0.0
    %710 = vmatprep.subr.mxu0 0.0
    %711 = vmatpush1.msra.mxu0 0.0
    %712 = vmatprep.subr.mxu0 0.0
    %713 = vmatpush1.msra.mxu0 0.0
    %714 = vmatprep.subr.mxu0 0.0
    %715 = vmatpush1.msra.mxu0 0.0
    %716 = vmatprep.subr.mxu0 0.0
    %717 = vmatpush1.msra.mxu0 0.0
    %718 = vmatprep.subr.mxu0 0.0
    %719 = vmatpush1.msra.mxu0 %v394
    %720 = vmatprep.subr.mxu0 0.0
    %721 = vmatpush2.msra.mxu0 0.0
    %722 = vmatprep.subr.mxu0 0.0
    %723 = vmatpush2.msra.mxu0 0.0
    %724 = vmatprep.subr.mxu0 0.0
    %725 = vmatpush2.msra.mxu0 0.0
    %726 = vmatprep.subr.mxu0 0.0
    %727 = vmatpush2.msra.mxu0 0.0
    %728 = vmatprep.subr.mxu0 0.0
    %729 = vmatpush2.msra.mxu0 0.0
    %730 = vmatprep.subr.mxu0 0.0
    %731 = vmatpush2.msra.mxu0 0.0
    %732 = vmatprep.subr.mxu0 0.0
    %733 = vmatpush2.msra.mxu0 0.0
    %734 = vmatprep.subr.mxu0 0.0
    %735 = vmatpush2.msra.mxu0 0.0
    %736 = vmatprep.subr.mxu0 0.0
    %737 = vmatpush2.msra.mxu0 0.0
    %738 = vmatprep.subr.mxu0 0.0
    %739 = vmatpush2.msra.mxu0 0.0
    %740 = vmatprep.subr.mxu0 0.0
    %741 = vmatpush2.msra.mxu0 0.0
    %742 = vmatprep.subr.mxu0 0.0
    %743 = vmatpush2.msra.mxu0 0.0
    %744 = vmatprep.subr.mxu0 0.0
    %745 = vmatpush2.msra.mxu0 0.0
    %746 = vmatprep.subr.mxu0 0.0
    %747 = vmatpush2.msra.mxu0 0.0
    %748 = vmatprep.subr.mxu0 0.0
    %749 = vmatpush2.msra.mxu0 0.0
    %750 = vmatprep.subr.mxu0 0.0
    %751 = vmatpush2.msra.mxu0 0.0
    %752 = vmatprep.mubr.f32.mxu0 0.0
    %753 = vmatmul.mubr.f32.gmra.mxu0 %v683
    %v754 = vpop.f32.mrf.mxu0
    %v755 = vadd.f32 %v674, %v754
    %v756 = vpop.f32.mrf.mxu0
    %757 = vmatprep.mubr.f32.mxu0 0.0
    %758 = vmatmul.mubr.f32.gmra.mxu0 %v686
    %v759 = vpop.f32.mrf.mxu0
    %v760 = vadd.f32 %v679, %v759
    %v761 = vpop.f32.mrf.mxu0
    %762 = vdwg.mxu0
    %763 = vrot.lane.b32.xlu0 %v180, 112
    %v764 = vpop.permute.xlu0 %763
    %765 = vrot.lane.b32.xlu0 %v185, 112
    %v766 = vpop.permute.xlu0 %765
    %767 = vrot.lane.b32.xlu0 %v180, 80
    %v768 = vpop.permute.xlu0 %767
    %769 = vrot.lane.b32.xlu0 %v185, 80
    %v770 = vpop.permute.xlu0 %769
    %v771 = vsel %vm196, %v764, 0
    %v773 = vsel %vm196, %v766, 0
    %v775 = vsel %vm196, %v768, 0
    %v777 = vsel %vm196, %v770, 0
    %779 = vmatprep.subr.mxu0 0.0
    %780 = vmatpush1.xpose.msra.mxu0 0.0
    %781 = vmatprep.subr.mxu0 0.0
    %782 = vmatpush1.xpose.msra.mxu0 0.0
    %783 = vmatprep.subr.mxu0 0.0
    %784 = vmatpush1.xpose.msra.mxu0 0.0
    %785 = vmatprep.subr.mxu0 0.0
    %786 = vmatpush1.xpose.msra.mxu0 0.0
    %787 = vmatprep.subr.mxu0 0.0
    %788 = vmatpush1.xpose.msra.mxu0 0.0
    %789 = vmatprep.subr.mxu0 0.0
    %790 = vmatpush1.xpose.msra.mxu0 0.0
    %791 = vmatprep.subr.mxu0 0.0
    %792 = vmatpush1.xpose.msra.mxu0 0.0
    %793 = vmatprep.subr.mxu0 0.0
    %794 = vmatpush1.xpose.msra.mxu0 0.0
    %795 = vmatprep.subr.mxu0 0.0
    %796 = vmatpush1.xpose.msra.mxu0 0.0
    %797 = vmatprep.subr.mxu0 0.0
    %798 = vmatpush1.xpose.msra.mxu0 0.0
    %799 = vmatprep.subr.mxu0 0.0
    %800 = vmatpush1.xpose.msra.mxu0 0.0
    %801 = vmatprep.subr.mxu0 0.0
    %802 = vmatpush1.xpose.msra.mxu0 0.0
    %803 = vmatprep.subr.mxu0 0.0
    %804 = vmatpush1.xpose.msra.mxu0 0.0
    %805 = vmatprep.subr.mxu0 0.0
    %806 = vmatpush1.xpose.msra.mxu0 0.0
    %807 = vmatprep.subr.mxu0 0.0
    %808 = vmatpush1.xpose.msra.mxu0 %v777
    %809 = vmatprep.subr.mxu0 0.0
    %810 = vmatpush1.xpose.msra.mxu0 %v775
    %811 = vmatprep.subr.mxu0 0.0
    %812 = vmatpush2.xpose.msra.mxu0 0.0
    %813 = vmatprep.subr.mxu0 0.0
    %814 = vmatpush2.xpose.msra.mxu0 0.0
    %815 = vmatprep.subr.mxu0 0.0
    %816 = vmatpush2.xpose.msra.mxu0 0.0
    %817 = vmatprep.subr.mxu0 0.0
    %818 = vmatpush2.xpose.msra.mxu0 0.0
    %819 = vmatprep.subr.mxu0 0.0
    %820 = vmatpush2.xpose.msra.mxu0 0.0
    %821 = vmatprep.subr.mxu0 0.0
    %822 = vmatpush2.xpose.msra.mxu0 0.0
    %823 = vmatprep.subr.mxu0 0.0
    %824 = vmatpush2.xpose.msra.mxu0 0.0
    %825 = vmatprep.subr.mxu0 0.0
    %826 = vmatpush2.xpose.msra.mxu0 0.0
    %827 = vmatprep.subr.mxu0 0.0
    %828 = vmatpush2.xpose.msra.mxu0 0.0
    %829 = vmatprep.subr.mxu0 0.0
    %830 = vmatpush2.xpose.msra.mxu0 0.0
    %831 = vmatprep.subr.mxu0 0.0
    %832 = vmatpush2.xpose.msra.mxu0 0.0
    %833 = vmatprep.subr.mxu0 0.0
    %834 = vmatpush2.xpose.msra.mxu0 0.0
    %835 = vmatprep.subr.mxu0 0.0
    %836 = vmatpush2.xpose.msra.mxu0 0.0
    %837 = vmatprep.subr.mxu0 0.0
    %838 = vmatpush2.xpose.msra.mxu0 0.0
    %839 = vmatprep.subr.mxu0 0.0
    %840 = vmatpush2.xpose.msra.mxu0 0.0
    %841 = vmatprep.subr.mxu0 0.0
    %842 = vmatpush2.xpose.msra.mxu0 0.0
    %843 = vmatprep.mubr.f32.mxu0 0.0
    %844 = vmatmul.mubr.f32.gmra.mxu0 %v771
    %v845 = vpop.f32.mrf.mxu0
    %v846 = vadd.f32 0.0, %v845
    %v847 = vpop.f32.mrf.mxu0
    %848 = vmatprep.mubr.f32.mxu0 0.0
    %849 = vmatmul.mubr.f32.gmra.mxu0 %v773
    %v850 = vpop.f32.mrf.mxu0
    %v851 = vadd.f32 0.0, %v850
    %v852 = vpop.f32.mrf.mxu0
    %853 = vdwg.mxu0
    %v854 = vmul.f32 %v846, 0.35355338
    %v855 = vmul.f32 %v851, 0.35355338
    %v856 = vadd.f32 %v854, %v188
    %v857 = vadd.f32 %v855, %v189
    %v858 = vsel %vm284, %v856, -inf
    %859 = vmax.xlane.f32.xlu0 %v858
    %v860 = vpop.xlane.xlu0 %859
    %v861 = vsel %vm284, %v857, -inf
    %862 = vmax.xlane.f32.xlu0 %v861
    %v863 = vpop.xlane.xlu0 %862
    %v864 = vsub.f32 %v856, %v860
    %v865 = vsub.f32 %v857, %v863
    %v866 = vmul.f32 %v864, 1.442695
    %v867 = vpow.pop %v866
    %v868 = vmul.f32 %v865, 1.442695
    %v869 = vpow.pop %v868
    %v870 = vsel %vm284, %v867, 0.0
    %871 = vadd.xlane.f32.xlu0 %v870
    %v872 = vpop.xlane.xlu0 %871
    %v873 = vsel %vm284, %v869, 0.0
    %874 = vadd.xlane.f32.xlu0 %v873
    %v875 = vpop.xlane.xlu0 %874
    %v876 = vrcp.pop %v872
    %v877 = vrcp.pop %v875
    %v878 = vmul.f32 %v867, %v876
    %v879 = vmul.f32 %v869, %v877
    %880 = vrot.lane.b32.xlu0 %v180, 48
    %v881 = vpop.permute.xlu0 %880
    %882 = vrot.lane.b32.xlu0 %v185, 48
    %v883 = vpop.permute.xlu0 %882
    %v887 = vsel %vm284, %v878, 0
    %v890 = vsel %vm284, %v879, 0
    %892 = vmatprep.subr.mxu0 0.0
    %893 = vmatpush1.msra.mxu0 0.0
    %894 = vmatprep.subr.mxu0 0.0
    %895 = vmatpush1.msra.mxu0 0.0
    %896 = vmatprep.subr.mxu0 0.0
    %897 = vmatpush1.msra.mxu0 0.0
    %898 = vmatprep.subr.mxu0 0.0
    %899 = vmatpush1.msra.mxu0 0.0
    %900 = vmatprep.subr.mxu0 0.0
    %901 = vmatpush1.msra.mxu0 0.0
    %902 = vmatprep.subr.mxu0 0.0
    %903 = vmatpush1.msra.mxu0 0.0
    %904 = vmatprep.subr.mxu0 0.0
    %905 = vmatpush1.msra.mxu0 0.0
    %906 = vmatprep.subr.mxu0 0.0
    %907 = vmatpush1.msra.mxu0 0.0
    %908 = vmatprep.subr.mxu0 0.0
    %909 = vmatpush1.msra.mxu0 0.0
    %910 = vmatprep.subr.mxu0 0.0
    %911 = vmatpush1.msra.mxu0 0.0
    %912 = vmatprep.subr.mxu0 0.0
    %913 = vmatpush1.msra.mxu0 0.0
    %914 = vmatprep.subr.mxu0 0.0
    %915 = vmatpush1.msra.mxu0 0.0
    %916 = vmatprep.subr.mxu0 0.0
    %917 = vmatpush1.msra.mxu0 0.0
    %918 = vmatprep.subr.mxu0 0.0
    %919 = vmatpush1.msra.mxu0 0.0
    %920 = vmatprep.subr.mxu0 0.0
    %921 = vmatpush1.msra.mxu0 %v883
    %922 = vmatprep.subr.mxu0 0.0
    %923 = vmatpush1.msra.mxu0 %v881
    %924 = vmatprep.subr.mxu0 0.0
    %925 = vmatpush2.msra.mxu0 0.0
    %926 = vmatprep.subr.mxu0 0.0
    %927 = vmatpush2.msra.mxu0 0.0
    %928 = vmatprep.subr.mxu0 0.0
    %929 = vmatpush2.msra.mxu0 0.0
    %930 = vmatprep.subr.mxu0 0.0
    %931 = vmatpush2.msra.mxu0 0.0
    %932 = vmatprep.subr.mxu0 0.0
    %933 = vmatpush2.msra.mxu0 0.0
    %934 = vmatprep.subr.mxu0 0.0
    %935 = vmatpush2.msra.mxu0 0.0
    %936 = vmatprep.subr.mxu0 0.0
    %937 = vmatpush2.msra.mxu0 0.0
    %938 = vmatprep.subr.mxu0 0.0
    %939 = vmatpush2.msra.mxu0 0.0
    %940 = vmatprep.subr.mxu0 0.0
    %941 = vmatpush2.msra.mxu0 0.0
    %942 = vmatprep.subr.mxu0 0.0
    %943 = vmatpush2.msra.mxu0 0.0
    %944 = vmatprep.subr.mxu0 0.0
    %945 = vmatpush2.msra.mxu0 0.0
    %946 = vmatprep.subr.mxu0 0.0
    %947 = vmatpush2.msra.mxu0 0.0
    %948 = vmatprep.subr.mxu0 0.0
    %949 = vmatpush2.msra.mxu0 0.0
    %950 = vmatprep.subr.mxu0 0.0
    %951 = vmatpush2.msra.mxu0 0.0
    %952 = vmatprep.subr.mxu0 0.0
    %953 = vmatpush2.msra.mxu0 0.0
    %954 = vmatprep.subr.mxu0 0.0
    %955 = vmatpush2.msra.mxu0 0.0
    %956 = vmatprep.mubr.f32.mxu0 0.0
    %957 = vmatmul.mubr.f32.gmra.mxu0 %v887
    %v958 = vpop.f32.mrf.mxu0
    %v959 = vadd.f32 0.0, %v958
    %v960 = vpop.f32.mrf.mxu0
    %961 = vmatprep.mubr.f32.mxu0 0.0
    %962 = vmatmul.mubr.f32.gmra.mxu0 %v890
    %v963 = vpop.f32.mrf.mxu0
    %v964 = vadd.f32 0.0, %v963
    %v965 = vpop.f32.mrf.mxu0
    %966 = vdwg.mxu0
    %s967 = scalar_lea.vmem %s6, 16
    %v968 = vld [vmem:[%s967] sm:$0xff]
    %v970 = vsel %vm196, %v959, 0
    %v973 = vsel %vm196, %v964, 0
    %975 = vmatprep.subr.mxu0 0.0
    %976 = vmatpush1.msra.mxu0 0.0
    %977 = vmatprep.subr.mxu0 0.0
    %978 = vmatpush1.msra.mxu0 0.0
    %979 = vmatprep.subr.mxu0 0.0
    %980 = vmatpush1.msra.mxu0 0.0
    %981 = vmatprep.subr.mxu0 0.0
    %982 = vmatpush1.msra.mxu0 0.0
    %983 = vmatprep.subr.mxu0 0.0
    %984 = vmatpush1.msra.mxu0 0.0
    %985 = vmatprep.subr.mxu0 0.0
    %986 = vmatpush1.msra.mxu0 0.0
    %987 = vmatprep.subr.mxu0 0.0
    %988 = vmatpush1.msra.mxu0 0.0
    %989 = vmatprep.subr.mxu0 0.0
    %990 = vmatpush1.msra.mxu0 0.0
    %991 = vmatprep.subr.mxu0 0.0
    %992 = vmatpush1.msra.mxu0 0.0
    %993 = vmatprep.subr.mxu0 0.0
    %994 = vmatpush1.msra.mxu0 0.0
    %995 = vmatprep.subr.mxu0 0.0
    %996 = vmatpush1.msra.mxu0 0.0
    %997 = vmatprep.subr.mxu0 0.0
    %998 = vmatpush1.msra.mxu0 0.0
    %999 = vmatprep.subr.mxu0 0.0
    %1000 = vmatpush1.msra.mxu0 0.0
    %1001 = vmatprep.subr.mxu0 0.0
    %1002 = vmatpush1.msra.mxu0 0.0
    %1003 = vmatprep.subr.mxu0 0.0
    %1004 = vmatpush1.msra.mxu0 0.0
    %1005 = vmatprep.subr.mxu0 0.0
    %1006 = vmatpush1.msra.mxu0 %v968
    %1007 = vmatprep.subr.mxu0 0.0
    %1008 = vmatpush2.msra.mxu0 0.0
    %1009 = vmatprep.subr.mxu0 0.0
    %1010 = vmatpush2.msra.mxu0 0.0
    %1011 = vmatprep.subr.mxu0 0.0
    %1012 = vmatpush2.msra.mxu0 0.0
    %1013 = vmatprep.subr.mxu0 0.0
    %1014 = vmatpush2.msra.mxu0 0.0
    %1015 = vmatprep.subr.mxu0 0.0
    %1016 = vmatpush2.msra.mxu0 0.0
    %1017 = vmatprep.subr.mxu0 0.0
    %1018 = vmatpush2.msra.mxu0 0.0
    %1019 = vmatprep.subr.mxu0 0.0
    %1020 = vmatpush2.msra.mxu0 0.0
    %1021 = vmatprep.subr.mxu0 0.0
    %1022 = vmatpush2.msra.mxu0 0.0
    %1023 = vmatprep.subr.mxu0 0.0
    %1024 = vmatpush2.msra.mxu0 0.0
    %1025 = vmatprep.subr.mxu0 0.0
    %1026 = vmatpush2.msra.mxu0 0.0
    %1027 = vmatprep.subr.mxu0 0.0
    %1028 = vmatpush2.msra.mxu0 0.0
    %1029 = vmatprep.subr.mxu0 0.0
    %1030 = vmatpush2.msra.mxu0 0.0
    %1031 = vmatprep.subr.mxu0 0.0
    %1032 = vmatpush2.msra.mxu0 0.0
    %1033 = vmatprep.subr.mxu0 0.0
    %1034 = vmatpush2.msra.mxu0 0.0
    %1035 = vmatprep.subr.mxu0 0.0
    %1036 = vmatpush2.msra.mxu0 0.0
    %1037 = vmatprep.subr.mxu0 0.0
    %1038 = vmatpush2.msra.mxu0 0.0
    %1039 = vmatprep.mubr.f32.mxu0 0.0
    %1040 = vmatmul.mubr.f32.gmra.mxu0 %v970
    %v1041 = vpop.f32.mrf.mxu0
    %v1042 = vadd.f32 0.0, %v1041
    %v1043 = vpop.f32.mrf.mxu0
    %1044 = vmatprep.mubr.f32.mxu0 0.0
    %1045 = vmatmul.mubr.f32.gmra.mxu0 %v973
    %v1046 = vpop.f32.mrf.mxu0
    %v1047 = vadd.f32 0.0, %v1046
    %v1048 = vpop.f32.mrf.mxu0
    %1049 = vdwg.mxu0
    %v1050 = vadd.f32 %v755, %v1042
    %v1051 = vadd.f32 %v760, %v1047
    %1052 = vrot.lane.b32.xlu0 %v180, 104
    %v1053 = vpop.permute.xlu0 %1052
    %1054 = vrot.lane.b32.xlu0 %v185, 104
    %v1055 = vpop.permute.xlu0 %1054
    %1056 = vrot.lane.b32.xlu0 %v180, 72
    %v1057 = vpop.permute.xlu0 %1056
    %1058 = vrot.lane.b32.xlu0 %v185, 72
    %v1059 = vpop.permute.xlu0 %1058
    %v1060 = vsel %vm196, %v1053, 0
    %v1062 = vsel %vm196, %v1055, 0
    %v1064 = vsel %vm196, %v1057, 0
    %v1066 = vsel %vm196, %v1059, 0
    %1068 = vmatprep.subr.mxu0 0.0
    %1069 = vmatpush1.xpose.msra.mxu0 0.0
    %1070 = vmatprep.subr.mxu0 0.0
    %1071 = vmatpush1.xpose.msra.mxu0 0.0
    %1072 = vmatprep.subr.mxu0 0.0
    %1073 = vmatpush1.xpose.msra.mxu0 0.0
    %1074 = vmatprep.subr.mxu0 0.0
    %1075 = vmatpush1.xpose.msra.mxu0 0.0
    %1076 = vmatprep.subr.mxu0 0.0
    %1077 = vmatpush1.xpose.msra.mxu0 0.0
    %1078 = vmatprep.subr.mxu0 0.0
    %1079 = vmatpush1.xpose.msra.mxu0 0.0
    %1080 = vmatprep.subr.mxu0 0.0
    %1081 = vmatpush1.xpose.msra.mxu0 0.0
    %1082 = vmatprep.subr.mxu0 0.0
    %1083 = vmatpush1.xpose.msra.mxu0 0.0
    %1084 = vmatprep.subr.mxu0 0.0
    %1085 = vmatpush1.xpose.msra.mxu0 0.0
    %1086 = vmatprep.subr.mxu0 0.0
    %1087 = vmatpush1.xpose.msra.mxu0 0.0
    %1088 = vmatprep.subr.mxu0 0.0
    %1089 = vmatpush1.xpose.msra.mxu0 0.0
    %1090 = vmatprep.subr.mxu0 0.0
    %1091 = vmatpush1.xpose.msra.mxu0 0.0
    %1092 = vmatprep.subr.mxu0 0.0
    %1093 = vmatpush1.xpose.msra.mxu0 0.0
    %1094 = vmatprep.subr.mxu0 0.0
    %1095 = vmatpush1.xpose.msra.mxu0 0.0
    %1096 = vmatprep.subr.mxu0 0.0
    %1097 = vmatpush1.xpose.msra.mxu0 %v1066
    %1098 = vmatprep.subr.mxu0 0.0
    %1099 = vmatpush1.xpose.msra.mxu0 %v1064
    %1100 = vmatprep.subr.mxu0 0.0
    %1101 = vmatpush2.xpose.msra.mxu0 0.0
    %1102 = vmatprep.subr.mxu0 0.0
    %1103 = vmatpush2.xpose.msra.mxu0 0.0
    %1104 = vmatprep.subr.mxu0 0.0
    %1105 = vmatpush2.xpose.msra.mxu0 0.0
    %1106 = vmatprep.subr.mxu0 0.0
    %1107 = vmatpush2.xpose.msra.mxu0 0.0
    %1108 = vmatprep.subr.mxu0 0.0
    %1109 = vmatpush2.xpose.msra.mxu0 0.0
    %1110 = vmatprep.subr.mxu0 0.0
    %1111 = vmatpush2.xpose.msra.mxu0 0.0
    %1112 = vmatprep.subr.mxu0 0.0
    %1113 = vmatpush2.xpose.msra.mxu0 0.0
    %1114 = vmatprep.subr.mxu0 0.0
    %1115 = vmatpush2.xpose.msra.mxu0 0.0
    %1116 = vmatprep.subr.mxu0 0.0
    %1117 = vmatpush2.xpose.msra.mxu0 0.0
    %1118 = vmatprep.subr.mxu0 0.0
    %1119 = vmatpush2.xpose.msra.mxu0 0.0
    %1120 = vmatprep.subr.mxu0 0.0
    %1121 = vmatpush2.xpose.msra.mxu0 0.0
    %1122 = vmatprep.subr.mxu0 0.0
    %1123 = vmatpush2.xpose.msra.mxu0 0.0
    %1124 = vmatprep.subr.mxu0 0.0
    %1125 = vmatpush2.xpose.msra.mxu0 0.0
    %1126 = vmatprep.subr.mxu0 0.0
    %1127 = vmatpush2.xpose.msra.mxu0 0.0
    %1128 = vmatprep.subr.mxu0 0.0
    %1129 = vmatpush2.xpose.msra.mxu0 0.0
    %1130 = vmatprep.subr.mxu0 0.0
    %1131 = vmatpush2.xpose.msra.mxu0 0.0
    %1132 = vmatprep.mubr.f32.mxu0 0.0
    %1133 = vmatmul.mubr.f32.gmra.mxu0 %v1060
    %v1134 = vpop.f32.mrf.mxu0
    %v1135 = vadd.f32 0.0, %v1134
    %v1136 = vpop.f32.mrf.mxu0
    %1137 = vmatprep.mubr.f32.mxu0 0.0
    %1138 = vmatmul.mubr.f32.gmra.mxu0 %v1062
    %v1139 = vpop.f32.mrf.mxu0
    %v1140 = vadd.f32 0.0, %v1139
    %v1141 = vpop.f32.mrf.mxu0
    %1142 = vdwg.mxu0
    %v1143 = vmul.f32 %v1135, 0.35355338
    %v1144 = vmul.f32 %v1140, 0.35355338
    %v1145 = vadd.f32 %v1143, %v188
    %v1146 = vadd.f32 %v1144, %v189
    %v1147 = vsel %vm284, %v1145, -inf
    %1148 = vmax.xlane.f32.xlu0 %v1147
    %v1149 = vpop.xlane.xlu0 %1148
    %v1150 = vsel %vm284, %v1146, -inf
    %1151 = vmax.xlane.f32.xlu0 %v1150
    %v1152 = vpop.xlane.xlu0 %1151
    %v1153 = vsub.f32 %v1145, %v1149
    %v1154 = vsub.f32 %v1146, %v1152
    %v1155 = vmul.f32 %v1153, 1.442695
    %v1156 = vpow.pop %v1155
    %v1157 = vmul.f32 %v1154, 1.442695
    %v1158 = vpow.pop %v1157
    %v1159 = vsel %vm284, %v1156, 0.0
    %1160 = vadd.xlane.f32.xlu0 %v1159
    %v1161 = vpop.xlane.xlu0 %1160
    %v1162 = vsel %vm284, %v1158, 0.0
    %1163 = vadd.xlane.f32.xlu0 %v1162
    %v1164 = vpop.xlane.xlu0 %1163
    %v1165 = vrcp.pop %v1161
    %v1166 = vrcp.pop %v1164
    %v1167 = vmul.f32 %v1156, %v1165
    %v1168 = vmul.f32 %v1158, %v1166
    %1169 = vrot.lane.b32.xlu0 %v180, 40
    %v1170 = vpop.permute.xlu0 %1169
    %1171 = vrot.lane.b32.xlu0 %v185, 40
    %v1172 = vpop.permute.xlu0 %1171
    %v1176 = vsel %vm284, %v1167, 0
    %v1179 = vsel %vm284, %v1168, 0
    %1181 = vmatprep.subr.mxu0 0.0
    %1182 = vmatpush1.msra.mxu0 0.0
    %1183 = vmatprep.subr.mxu0 0.0
    %1184 = vmatpush1.msra.mxu0 0.0
    %1185 = vmatprep.subr.mxu0 0.0
    %1186 = vmatpush1.msra.mxu0 0.0
    %1187 = vmatprep.subr.mxu0 0.0
    %1188 = vmatpush1.msra.mxu0 0.0
    %1189 = vmatprep.subr.mxu0 0.0
    %1190 = vmatpush1.msra.mxu0 0.0
    %1191 = vmatprep.subr.mxu0 0.0
    %1192 = vmatpush1.msra.mxu0 0.0
    %1193 = vmatprep.subr.mxu0 0.0
    %1194 = vmatpush1.msra.mxu0 0.0
    %1195 = vmatprep.subr.mxu0 0.0
    %1196 = vmatpush1.msra.mxu0 0.0
    %1197 = vmatprep.subr.mxu0 0.0
    %1198 = vmatpush1.msra.mxu0 0.0
    %1199 = vmatprep.subr.mxu0 0.0
    %1200 = vmatpush1.msra.mxu0 0.0
    %1201 = vmatprep.subr.mxu0 0.0
    %1202 = vmatpush1.msra.mxu0 0.0
    %1203 = vmatprep.subr.mxu0 0.0
    %1204 = vmatpush1.msra.mxu0 0.0
    %1205 = vmatprep.subr.mxu0 0.0
    %1206 = vmatpush1.msra.mxu0 0.0
    %1207 = vmatprep.subr.mxu0 0.0
    %1208 = vmatpush1.msra.mxu0 0.0
    %1209 = vmatprep.subr.mxu0 0.0
    %1210 = vmatpush1.msra.mxu0 %v1172
    %1211 = vmatprep.subr.mxu0 0.0
    %1212 = vmatpush1.msra.mxu0 %v1170
    %1213 = vmatprep.subr.mxu0 0.0
    %1214 = vmatpush2.msra.mxu0 0.0
    %1215 = vmatprep.subr.mxu0 0.0
    %1216 = vmatpush2.msra.mxu0 0.0
    %1217 = vmatprep.subr.mxu0 0.0
    %1218 = vmatpush2.msra.mxu0 0.0
    %1219 = vmatprep.subr.mxu0 0.0
    %1220 = vmatpush2.msra.mxu0 0.0
    %1221 = vmatprep.subr.mxu0 0.0
    %1222 = vmatpush2.msra.mxu0 0.0
    %1223 = vmatprep.subr.mxu0 0.0
    %1224 = vmatpush2.msra.mxu0 0.0
    %1225 = vmatprep.subr.mxu0 0.0
    %1226 = vmatpush2.msra.mxu0 0.0
    %1227 = vmatprep.subr.mxu0 0.0
    %1228 = vmatpush2.msra.mxu0 0.0
    %1229 = vmatprep.subr.mxu0 0.0
    %1230 = vmatpush2.msra.mxu0 0.0
    %1231 = vmatprep.subr.mxu0 0.0
    %1232 = vmatpush2.msra.mxu0 0.0
    %1233 = vmatprep.subr.mxu0 0.0
    %1234 = vmatpush2.msra.mxu0 0.0
    %1235 = vmatprep.subr.mxu0 0.0
    %1236 = vmatpush2.msra.mxu0 0.0
    %1237 = vmatprep.subr.mxu0 0.0
    %1238 = vmatpush2.msra.mxu0 0.0
    %1239 = vmatprep.subr.mxu0 0.0
    %1240 = vmatpush2.msra.mxu0 0.0
    %1241 = vmatprep.subr.mxu0 0.0
    %1242 = vmatpush2.msra.mxu0 0.0
    %1243 = vmatprep.subr.mxu0 0.0
    %1244 = vmatpush2.msra.mxu0 0.0
    %1245 = vmatprep.mubr.f32.mxu0 0.0
    %1246 = vmatmul.mubr.f32.gmra.mxu0 %v1176
    %v1247 = vpop.f32.mrf.mxu0
    %v1248 = vadd.f32 0.0, %v1247
    %v1249 = vpop.f32.mrf.mxu0
    %1250 = vmatprep.mubr.f32.mxu0 0.0
    %1251 = vmatmul.mubr.f32.gmra.mxu0 %v1179
    %v1252 = vpop.f32.mrf.mxu0
    %v1253 = vadd.f32 0.0, %v1252
    %v1254 = vpop.f32.mrf.mxu0
    %1255 = vdwg.mxu0
    %s1256 = scalar_lea.vmem %s6, 24
    %v1257 = vld [vmem:[%s1256] sm:$0xff]
    %v1259 = vsel %vm196, %v1248, 0
    %v1262 = vsel %vm196, %v1253, 0
    %1264 = vmatprep.subr.mxu0 0.0
    %1265 = vmatpush1.msra.mxu0 0.0
    %1266 = vmatprep.subr.mxu0 0.0
    %1267 = vmatpush1.msra.mxu0 0.0
    %1268 = vmatprep.subr.mxu0 0.0
    %1269 = vmatpush1.msra.mxu0 0.0
    %1270 = vmatprep.subr.mxu0 0.0
    %1271 = vmatpush1.msra.mxu0 0.0
    %1272 = vmatprep.subr.mxu0 0.0
    %1273 = vmatpush1.msra.mxu0 0.0
    %1274 = vmatprep.subr.mxu0 0.0
    %1275 = vmatpush1.msra.mxu0 0.0
    %1276 = vmatprep.subr.mxu0 0.0
    %1277 = vmatpush1.msra.mxu0 0.0
    %1278 = vmatprep.subr.mxu0 0.0
    %1279 = vmatpush1.msra.mxu0 0.0
    %1280 = vmatprep.subr.mxu0 0.0
    %1281 = vmatpush1.msra.mxu0 0.0
    %1282 = vmatprep.subr.mxu0 0.0
    %1283 = vmatpush1.msra.mxu0 0.0
    %1284 = vmatprep.subr.mxu0 0.0
    %1285 = vmatpush1.msra.mxu0 0.0
    %1286 = vmatprep.subr.mxu0 0.0
    %1287 = vmatpush1.msra.mxu0 0.0
    %1288 = vmatprep.subr.mxu0 0.0
    %1289 = vmatpush1.msra.mxu0 0.0
    %1290 = vmatprep.subr.mxu0 0.0
    %1291 = vmatpush1.msra.mxu0 0.0
    %1292 = vmatprep.subr.mxu0 0.0
    %1293 = vmatpush1.msra.mxu0 0.0
    %1294 = vmatprep.subr.mxu0 0.0
    %1295 = vmatpush1.msra.mxu0 %v1257
    %1296 = vmatprep.subr.mxu0 0.0
    %1297 = vmatpush2.msra.mxu0 0.0
    %1298 = vmatprep.subr.mxu0 0.0
    %1299 = vmatpush2.msra.mxu0 0.0
    %1300 = vmatprep.subr.mxu0 0.0
    %1301 = vmatpush2.msra.mxu0 0.0
    %1302 = vmatprep.subr.mxu0 0.0
    %1303 = vmatpush2.msra.mxu0 0.0
    %1304 = vmatprep.subr.mxu0 0.0
    %1305 = vmatpush2.msra.mxu0 0.0
    %1306 = vmatprep.subr.mxu0 0.0
    %1307 = vmatpush2.msra.mxu0 0.0
    %1308 = vmatprep.subr.mxu0 0.0
    %1309 = vmatpush2.msra.mxu0 0.0
    %1310 = vmatprep.subr.mxu0 0.0
    %1311 = vmatpush2.msra.mxu0 0.0
    %1312 = vmatprep.subr.mxu0 0.0
    %1313 = vmatpush2.msra.mxu0 0.0
    %1314 = vmatprep.subr.mxu0 0.0
    %1315 = vmatpush2.msra.mxu0 0.0
    %1316 = vmatprep.subr.mxu0 0.0
    %1317 = vmatpush2.msra.mxu0 0.0
    %1318 = vmatprep.subr.mxu0 0.0
    %1319 = vmatpush2.msra.mxu0 0.0
    %1320 = vmatprep.subr.mxu0 0.0
    %1321 = vmatpush2.msra.mxu0 0.0
    %1322 = vmatprep.subr.mxu0 0.0
    %1323 = vmatpush2.msra.mxu0 0.0
    %1324 = vmatprep.subr.mxu0 0.0
    %1325 = vmatpush2.msra.mxu0 0.0
    %1326 = vmatprep.subr.mxu0 0.0
    %1327 = vmatpush2.msra.mxu0 0.0
    %1328 = vmatprep.mubr.f32.mxu0 0.0
    %1329 = vmatmul.mubr.f32.gmra.mxu0 %v1259
    %v1330 = vpop.f32.mrf.mxu0
    %v1331 = vadd.f32 0.0, %v1330
    %v1332 = vpop.f32.mrf.mxu0
    %1333 = vmatprep.mubr.f32.mxu0 0.0
    %1334 = vmatmul.mubr.f32.gmra.mxu0 %v1262
    %v1335 = vpop.f32.mrf.mxu0
    %v1336 = vadd.f32 0.0, %v1335
    %v1337 = vpop.f32.mrf.mxu0
    %1338 = vdwg.mxu0
    %v1339 = vadd.f32 %v1050, %v1331
    %v1340 = vadd.f32 %v1051, %v1336
    %v1341 = vld [vmem:[%s7] sm:$0x1]
    %v1343 = vlaneseq
    %v1344 = vshrl.u32 %v1343, 7
    %v1345 = vsub.s32 0, %v1344
    %v1346 = vrot.slane %v1341, %v1345
    %v1348 = vadd.f32 %v1339, %v1346
    %v1349 = vadd.f32 %v1340, %v1346
    %v1350 = vadd.f32 %v48, %v1348
    %v1351 = vadd.f32 %v49, %v1349
    %v1352 = vld [vmem:[%s8] sm:$0x1]
    %v1353 = vld [vmem:[%s9] sm:$0x1]
    %v1354 = vsel %vm52, %v1350, 0.0
    %1355 = vadd.xlane.f32.xlu0 %v1354
    %v1356 = vpop.xlane.xlu0 %1355
    %v1357 = vsel %vm52, %v1351, 0.0
    %1358 = vadd.xlane.f32.xlu0 %v1357
    %v1359 = vpop.xlane.xlu0 %1358
    %v1360 = vmul.f32 %v1356, %v59
    %v1361 = vmul.f32 %v1359, %v59
    %v1362 = vsub.f32 %v1350, %v1360
    %v1363 = vsub.f32 %v1351, %v1361
    %v1364 = vmul.f32 %v1362, %v1362
    %v1365 = vmul.f32 %v1363, %v1363
    %v1366 = vsel %vm52, %v1364, 0.0
    %1367 = vadd.xlane.f32.xlu0 %v1366
    %v1368 = vpop.xlane.xlu0 %1367
    %v1369 = vsel %vm52, %v1365, 0.0
    %1370 = vadd.xlane.f32.xlu0 %v1369
    %v1371 = vpop.xlane.xlu0 %1370
    %v1372 = vmul.f32 %v1368, %v59
    %v1373 = vmul.f32 %v1371, %v59
    %v1374 = vadd.f32 %v1372, 1e-05
    %v1375 = vadd.f32 %v1373, 1e-05
    %v1376 = vrsqrt.pop %v1374
    %v1377 = vrsqrt.pop %v1375
    %v1378 = vmul.f32 %v1362, %v1376
    %v1379 = vmul.f32 %v1363, %v1377
    %v1381 = vlaneseq
    %v1382 = vshrl.u32 %v1381, 7
    %v1383 = vsub.s32 0, %v1382
    %v1384 = vrot.slane %v1352, %v1383
    %v1386 = vmul.f32 %v1378, %v1384
    %v1387 = vmul.f32 %v1379, %v1384
    %v1389 = vlaneseq
    %v1390 = vshrl.u32 %v1389, 7
    %v1391 = vsub.s32 0, %v1390
    %v1392 = vrot.slane %v1353, %v1391
    %v1394 = vadd.f32 %v1386, %v1392
    %v1395 = vadd.f32 %v1387, %v1392
    %v1396 = vld [vmem:[%s10] sm:$0xff]
    %v1397 = vld [vmem:[%s10 + $0x8] sm:$0xff]
    %v1398 = vld [vmem:[%s10 + $0x10] sm:$0xff]
    %v1399 = vld [vmem:[%s10 + $0x18] sm:$0xff]
    %v1400 = vld [vmem:[%s11] sm:$0x1]
    %v1402 = vlaneseq
    %v1403 = vshrl.u32 %v1402, 7
    %v1404 = vsub.s32 0, %v1403
    %v1405 = vrot.slane %v1400, %v1404
    %v1408 = vsel %vm52, %v1394, 0
    %v1411 = vsel %vm52, %v1395, 0
    %1413 = vmatprep.subr.mxu0 0.0
    %1414 = vmatpush1.msra.mxu0 0.0
    %1415 = vmatprep.subr.mxu0 0.0
    %1416 = vmatpush1.msra.mxu0 0.0
    %1417 = vmatprep.subr.mxu0 0.0
    %1418 = vmatpush1.msra.mxu0 0.0
    %1419 = vmatprep.subr.mxu0 0.0
    %1420 = vmatpush1.msra.mxu0 0.0
    %1421 = vmatprep.subr.mxu0 0.0
    %1422 = vmatpush1.msra.mxu0 0.0
    %1423 = vmatprep.subr.mxu0 0.0
    %1424 = vmatpush1.msra.mxu0 0.0
    %1425 = vmatprep.subr.mxu0 0.0
    %1426 = vmatpush1.msra.mxu0 0.0
    %1427 = vmatprep.subr.mxu0 0.0
    %1428 = vmatpush1.msra.mxu0 0.0
    %1429 = vmatprep.subr.mxu0 0.0
    %1430 = vmatpush1.msra.mxu0 0.0
    %1431 = vmatprep.subr.mxu0 0.0
    %1432 = vmatpush1.msra.mxu0 0.0
    %1433 = vmatprep.subr.mxu0 0.0
    %1434 = vmatpush1.msra.mxu0 0.0
    %1435 = vmatprep.subr.mxu0 0.0
    %1436 = vmatpush1.msra.mxu0 0.0
    %1437 = vmatprep.subr.mxu0 0.0
    %1438 = vmatpush1.msra.mxu0 %v1399
    %1439 = vmatprep.subr.mxu0 0.0
    %1440 = vmatpush1.msra.mxu0 %v1398
    %1441 = vmatprep.subr.mxu0 0.0
    %1442 = vmatpush1.msra.mxu0 %v1397
    %1443 = vmatprep.subr.mxu0 0.0
    %1444 = vmatpush1.msra.mxu0 %v1396
    %1445 = vmatprep.subr.mxu0 0.0
    %1446 = vmatpush2.msra.mxu0 0.0
    %1447 = vmatprep.subr.mxu0 0.0
    %1448 = vmatpush2.msra.mxu0 0.0
    %1449 = vmatprep.subr.mxu0 0.0
    %1450 = vmatpush2.msra.mxu0 0.0
    %1451 = vmatprep.subr.mxu0 0.0
    %1452 = vmatpush2.msra.mxu0 0.0
    %1453 = vmatprep.subr.mxu0 0.0
    %1454 = vmatpush2.msra.mxu0 0.0
    %1455 = vmatprep.subr.mxu0 0.0
    %1456 = vmatpush2.msra.mxu0 0.0
    %1457 = vmatprep.subr.mxu0 0.0
    %1458 = vmatpush2.msra.mxu0 0.0
    %1459 = vmatprep.subr.mxu0 0.0
    %1460 = vmatpush2.msra.mxu0 0.0
    %1461 = vmatprep.subr.mxu0 0.0
    %1462 = vmatpush2.msra.mxu0 0.0
    %1463 = vmatprep.subr.mxu0 0.0
    %1464 = vmatpush2.msra.mxu0 0.0
    %1465 = vmatprep.subr.mxu0 0.0
    %1466 = vmatpush2.msra.mxu0 0.0
    %1467 = vmatprep.subr.mxu0 0.0
    %1468 = vmatpush2.msra.mxu0 0.0
    %1469 = vmatprep.subr.mxu0 0.0
    %1470 = vmatpush2.msra.mxu0 0.0
    %1471 = vmatprep.subr.mxu0 0.0
    %1472 = vmatpush2.msra.mxu0 0.0
    %1473 = vmatprep.subr.mxu0 0.0
    %1474 = vmatpush2.msra.mxu0 0.0
    %1475 = vmatprep.subr.mxu0 0.0
    %1476 = vmatpush2.msra.mxu0 0.0
    %1477 = vmatprep.mubr.f32.mxu0 0.0
    %1478 = vmatmul.mubr.f32.gmra.mxu0 %v1408
    %v1479 = vpop.f32.mrf.mxu0
    %v1480 = vadd.f32 %v1405, %v1479
    %v1481 = vpop.f32.mrf.mxu0
    %1482 = vmatprep.mubr.f32.mxu0 0.0
    %1483 = vmatmul.mubr.f32.gmra.mxu0 %v1411
    %v1484 = vpop.f32.mrf.mxu0
    %v1485 = vadd.f32 %v1405, %v1484
    %v1486 = vpop.f32.mrf.mxu0
    %1487 = vdwg.mxu0
    %v1488 = vmul.f32 %v1480, 0.5
    %v1489 = vmul.f32 %v1485, 0.5
    %v1490 = vmul.f32 %v1480, 0.044715
    %v1491 = vmul.f32 %v1485, 0.044715
    %v1492 = vmul.f32 %v1490, %v1480
    %v1493 = vmul.f32 %v1491, %v1485
    %v1494 = vmul.f32 %v1492, %v1480
    %v1495 = vmul.f32 %v1493, %v1485
    %v1496 = vadd.f32 %v1480, %v1494
    %v1497 = vadd.f32 %v1485, %v1495
    %v1498 = vmul.f32 %v1496, 0.7978846
    %v1499 = vmul.f32 %v1497, 0.7978846
    %v1500 = vtanh.pop %v1498
    %v1501 = vtanh.pop %v1499
    %v1502 = vadd.f32 %v1500, 1.0
    %v1503 = vadd.f32 %v1501, 1.0
    %v1504 = vmul.f32 %v1488, %v1502
    %v1505 = vmul.f32 %v1489, %v1503
    %v1506 = vld [vmem:[%s12] sm:$0xff]
    %v1507 = vld [vmem:[%s12 + $0x8] sm:$0xff]
    %v1508 = vld [vmem:[%s12 + $0x10] sm:$0xff]
    %v1509 = vld [vmem:[%s12 + $0x18] sm:$0xff]
    %v1510 = vld [vmem:[%s12 + $0x20] sm:$0xff]
    %v1511 = vld [vmem:[%s12 + $0x28] sm:$0xff]
    %v1512 = vld [vmem:[%s12 + $0x30] sm:$0xff]
    %v1513 = vld [vmem:[%s12 + $0x38] sm:$0xff]
    %v1514 = vld [vmem:[%s12 + $0x40] sm:$0xff]
    %v1515 = vld [vmem:[%s12 + $0x48] sm:$0xff]
    %v1516 = vld [vmem:[%s12 + $0x50] sm:$0xff]
    %v1517 = vld [vmem:[%s12 + $0x58] sm:$0xff]
    %v1518 = vld [vmem:[%s12 + $0x60] sm:$0xff]
    %v1519 = vld [vmem:[%s12 + $0x68] sm:$0xff]
    %v1520 = vld [vmem:[%s12 + $0x70] sm:$0xff]
    %v1521 = vld [vmem:[%s12 + $0x78] sm:$0xff]
    %v1522 = vld [vmem:[%s13] sm:$0x1]
    %v1524 = vlaneseq
    %v1525 = vshrl.u32 %v1524, 7
    %v1526 = vsub.s32 0, %v1525
    %v1527 = vrot.slane %v1522, %v1526
    %1529 = vmatprep.subr.mxu0 0.0
    %1530 = vmatpush1.msra.mxu0 %v1521
    %1531 = vmatprep.subr.mxu0 0.0
    %1532 = vmatpush1.msra.mxu0 %v1520
    %1533 = vmatprep.subr.mxu0 0.0
    %1534 = vmatpush1.msra.mxu0 %v1519
    %1535 = vmatprep.subr.mxu0 0.0
    %1536 = vmatpush1.msra.mxu0 %v1518
    %1537 = vmatprep.subr.mxu0 0.0
    %1538 = vmatpush1.msra.mxu0 %v1517
    %1539 = vmatprep.subr.mxu0 0.0
    %1540 = vmatpush1.msra.mxu0 %v1516
    %1541 = vmatprep.subr.mxu0 0.0
    %1542 = vmatpush1.msra.mxu0 %v1515
    %1543 = vmatprep.subr.mxu0 0.0
    %1544 = vmatpush1.msra.mxu0 %v1514
    %1545 = vmatprep.subr.mxu0 0.0
    %1546 = vmatpush1.msra.mxu0 %v1513
    %1547 = vmatprep.subr.mxu0 0.0
    %1548 = vmatpush1.msra.mxu0 %v1512
    %1549 = vmatprep.subr.mxu0 0.0
    %1550 = vmatpush1.msra.mxu0 %v1511
    %1551 = vmatprep.subr.mxu0 0.0
    %1552 = vmatpush1.msra.mxu0 %v1510
    %1553 = vmatprep.subr.mxu0 0.0
    %1554 = vmatpush1.msra.mxu0 %v1509
    %1555 = vmatprep.subr.mxu0 0.0
    %1556 = vmatpush1.msra.mxu0 %v1508
    %1557 = vmatprep.subr.mxu0 0.0
    %1558 = vmatpush1.msra.mxu0 %v1507
    %1559 = vmatprep.subr.mxu0 0.0
    %1560 = vmatpush1.msra.mxu0 %v1506
    %1561 = vmatprep.subr.mxu0 0.0
    %1562 = vmatpush2.msra.mxu0 0.0
    %1563 = vmatprep.subr.mxu0 0.0
    %1564 = vmatpush2.msra.mxu0 0.0
    %1565 = vmatprep.subr.mxu0 0.0
    %1566 = vmatpush2.msra.mxu0 0.0
    %1567 = vmatprep.subr.mxu0 0.0
    %1568 = vmatpush2.msra.mxu0 0.0
    %1569 = vmatprep.subr.mxu0 0.0
    %1570 = vmatpush2.msra.mxu0 0.0
    %1571 = vmatprep.subr.mxu0 0.0
    %1572 = vmatpush2.msra.mxu0 0.0
    %1573 = vmatprep.subr.mxu0 0.0
    %1574 = vmatpush2.msra.mxu0 0.0
    %1575 = vmatprep.subr.mxu0 0.0
    %1576 = vmatpush2.msra.mxu0 0.0
    %1577 = vmatprep.subr.mxu0 0.0
    %1578 = vmatpush2.msra.mxu0 0.0
    %1579 = vmatprep.subr.mxu0 0.0
    %1580 = vmatpush2.msra.mxu0 0.0
    %1581 = vmatprep.subr.mxu0 0.0
    %1582 = vmatpush2.msra.mxu0 0.0
    %1583 = vmatprep.subr.mxu0 0.0
    %1584 = vmatpush2.msra.mxu0 0.0
    %1585 = vmatprep.subr.mxu0 0.0
    %1586 = vmatpush2.msra.mxu0 0.0
    %1587 = vmatprep.subr.mxu0 0.0
    %1588 = vmatpush2.msra.mxu0 0.0
    %1589 = vmatprep.subr.mxu0 0.0
    %1590 = vmatpush2.msra.mxu0 0.0
    %1591 = vmatprep.subr.mxu0 0.0
    %1592 = vmatpush2.msra.mxu0 0.0
    %1593 = vmatprep.mubr.f32.mxu0 0.0
    %1594 = vmatmul.mubr.f32.gmra.mxu0 %v1504
    %v1595 = vpop.f32.mrf.mxu0
    %v1596 = vadd.f32 %v1527, %v1595
    %v1597 = vpop.f32.mrf.mxu0
    %1598 = vmatprep.mubr.f32.mxu0 0.0
    %1599 = vmatmul.mubr.f32.gmra.mxu0 %v1505
    %v1600 = vpop.f32.mrf.mxu0
    %v1601 = vadd.f32 %v1527, %v1600
    %v1602 = vpop.f32.mrf.mxu0
    %1603 = vdwg.mxu0
    %v1604 = vadd.f32 %v1350, %v1596
    %v1605 = vadd.f32 %v1351, %v1601
    %1606 = vst.msk [vmem:[#allocation2] sm:$0xff] %vm52, %v1604
    %1607 = vst.msk [vmem:[#allocation2 + $0x8] sm:$0xff] %vm52, %v1605
    // Predicated region
    $region58: #{_gpt2_block_impl.1} parent=1 // pred_check
      _
    $region59: #{_gpt2_block_impl.1} parent=1 // pred_check_branch
      %1609 = sbr.rel (0) target = $region61
    $region60: #{_gpt2_block_impl.1} parent=1 // pred_region
      %s1611 = ssub.s32 256, 256
      %1612 = vsyncadd [#allocation3], %s1611
      %s1613 = sshll.u32 [#allocation2], 4
      %s1614 = int_to_ptr.vmem [resolvable:$true] %s1613
      %1619 = dma.vmem_to_hbm [thread:$0]  %s1614, 256, %s14, [#allocation3], 128, 128, 8
    $region61: #{_gpt2_block_impl.1} parent=1 // pred_fallthru
      _
    // Predicated region
    $region62: #{_gpt2_block_impl.1} parent=1 // pred_check
      _
    $region63: #{_gpt2_block_impl.1} parent=1 // pred_check_branch
      %1621 = sbr.rel (0) target = $region65
    $region64: #{_gpt2_block_impl.1} parent=1 // pred_region
      %1622 = dma.done [#allocation3], 256
    $region65: #{_gpt2_block_impl.1} parent=1 // pred_fallthru
      _
    %1623 = vsyncpa [#allocation3], 1

</llo_original>
